<compile_context>
chip_gen: v5e
topology: v5e:2x2
jax: 0.10.0
libtpu: 0.0.40
codegen_flags: <defaults>
</compile_context>

<pallas_src>
import functools

import jax
import jax.numpy as jnp
from jax.experimental import pallas as pl
from jax.experimental.pallas import tpu as pltpu


# ----------------------------- configuration -------------------------------
DOMAIN_SIZE = 32      # opt.domain_size
YUCE_DIM_1  = 128     # opt.yuce_dim_1  (lane-dense)
YUCE_DIM_2  = 128     # opt.yuce_dim_2  (lane-dense)
LATENT_DIM  = 32      # opt.latent_dim
BATCH       = 8       # rows per independent forward (one BN group)
N_GROUPS    = 64      # independent forwards stacked into one pallas_call
BN_EPS      = 0.8     # BatchNorm1d(out_feat, 0.8) -> eps = 0.8
LRELU_SLOPE = 0.2

# Max groups folded into one grid step.  256 groups * 8 rows = 2048 rows per
# step; VMEM footprint per step is < 2 MiB, safely under the 16/32/32 MiB
# scoped-VMEM defaults of v5e/v6e/v7x.
MAX_GROUPS_PER_STEP = 256


def _pick_groups_per_step(num_groups: int) -> int:
    """Largest divisor of num_groups that (a) stays under the VMEM cap and
    (b) keeps >= 2 grid steps when possible (v7x dual-TensorCore split)."""
    target = max(1, min(num_groups // 2, MAX_GROUPS_PER_STEP))
    gb = max(1, min(target, num_groups))
    while num_groups % gb:
        gb -= 1
    return gb


# ------------------------------- kernel ------------------------------------
def feature_extractor_kernel(x_ref, w1_ref, b1_ref, w2_ref, b2_ref,
                             w3_ref, b3_ref, out_ref, *, batch):
    x = x_ref[...]                                            # (M, Din) f32
    rows = x.shape[0]
    gb = rows // batch                                        # groups / step

    # ---- Linear 1: (M, Din) @ (Din, H1) + (1, H1) ----
    h = jnp.dot(x, w1_ref[...], preferred_element_type=jnp.float32)
    h = h + b1_ref[...]

    # ---- BatchNorm1d per group (training mode: batch stats, biased var) ----
    # gamma=1 / beta=0 (PyTorch affine defaults) folded out -> identity.
    # (gb, batch, H1): batch==8 lands on the sublane axis -> cheap reduce.
    hg = h.reshape(gb, batch, YUCE_DIM_1)
    inv_b = 1.0 / batch                                       # compile-time
    mean = jnp.sum(hg, axis=1, keepdims=True) * inv_b         # (gb, 1, H1)
    mean_sq = jnp.sum(hg * hg, axis=1, keepdims=True) * inv_b
    var = mean_sq - mean * mean
    hg = (hg - mean) * jax.lax.rsqrt(var + BN_EPS)
    h = hg.reshape(rows, YUCE_DIM_1)

    # ---- LeakyReLU(0.2): single vmax ----
    h = jnp.maximum(h, LRELU_SLOPE * h)

    # ---- Linear 2 + LeakyReLU(0.2) ----
    h = jnp.dot(h, w2_ref[...], preferred_element_type=jnp.float32)
    h = h + b2_ref[...]
    h = jnp.maximum(h, LRELU_SLOPE * h)

    # ---- Linear 3 + Tanh ----
    z = jnp.dot(h, w3_ref[...], preferred_element_type=jnp.float32)
    z = z + b3_ref[...]
    out_ref[...] = jnp.tanh(z)                                # (M, latent)


# ------------------------------- wrapper ------------------------------------
def feature_extractor_forward(x_groups, params):
    """x_groups: (G, B, DOMAIN_SIZE) -- G independent forward passes."""
    w1, b1, w2, b2, w3, b3 = params
    G, B, D = x_groups.shape
    H1, H2, L = w1.shape[1], w2.shape[1], w3.shape[1]

    gb = _pick_groups_per_step(G)          # groups per grid step
    rows = gb * B                          # matmul M dimension per step
    grid = (G // gb,)

    x_flat = x_groups.reshape(G * B, D)    # contiguous -> free reshape

    out = pl.pallas_call(
        functools.partial(feature_extractor_kernel, batch=B),
        grid=grid,
        in_specs=[
            pl.BlockSpec((rows, D), lambda g: (g, 0)),     # x slab
            pl.BlockSpec((D, H1),   lambda g: (0, 0)),     # w1
            pl.BlockSpec((1, H1),   lambda g: (0, 0)),     # b1
            pl.BlockSpec((H1, H2),  lambda g: (0, 0)),     # w2
            pl.BlockSpec((1, H2),   lambda g: (0, 0)),     # b2
            pl.BlockSpec((H2, L),   lambda g: (0, 0)),     # w3
            pl.BlockSpec((1, L),    lambda g: (0, 0)),     # b3
        ],
        out_specs=pl.BlockSpec((rows, L), lambda g: (g, 0)),
        out_shape=jax.ShapeDtypeStruct((G * B, L), jnp.float32),
        compiler_params=pltpu.CompilerParams(
            dimension_semantics=("parallel",)),   # v7x dual-TC split
    )(x_flat, w1, b1, w2, b2, w3, b3)

    return out.reshape(G, B, L)


# ------------------------- pure-JAX reference -------------------------------
def feature_extractor_ref(x, params):
    w1, b1, w2, b2, w3, b3 = params
    hp = jax.lax.Precision.HIGHEST
    h = jnp.dot(x, w1, precision=hp) + b1
    mean = jnp.mean(h, axis=0, keepdims=True)
    var = jnp.mean((h - mean) ** 2, axis=0, keepdims=True)
    h = (h - mean) / jnp.sqrt(var + BN_EPS)
    h = jnp.where(h > 0, h, LRELU_SLOPE * h)
    h = jnp.dot(h, w2, precision=hp) + b2
    h = jnp.where(h > 0, h, LRELU_SLOPE * h)
    return jnp.tanh(jnp.dot(h, w3, precision=hp) + b3)


# --------------------------- parameter init ---------------------------------
def init_params(key):
    ks = jax.random.split(key, 6)

    def linear(kw, kb, fan_in, fan_out):
        # PyTorch Linear default init: U(-1/sqrt(fan_in), 1/sqrt(fan_in)).
        bound = 1.0 / (fan_in ** 0.5)
        w = jax.random.uniform(kw, (fan_in, fan_out), jnp.float32, -bound, bound)
        b = jax.random.uniform(kb, (1, fan_out), jnp.float32, -bound, bound)
        return w, b

    w1, b1 = linear(ks[0], ks[1], DOMAIN_SIZE, YUCE_DIM_1)
    w2, b2 = linear(ks[2], ks[3], YUCE_DIM_1, YUCE_DIM_2)
    w3, b3 = linear(ks[4], ks[5], YUCE_DIM_2, LATENT_DIM)
    return (w1, b1, w2, b2, w3, b3)


if __name__ == "__main__":
    key = jax.random.PRNGKey(0)
    k_x, k_p = jax.random.split(key)
    x = jax.random.normal(k_x, (N_GROUPS, BATCH, DOMAIN_SIZE), jnp.float32)
    params = init_params(k_p)

    out = jax.jit(feature_extractor_forward)(x, params)
    out = jax.block_until_ready(out)

    ref = jax.vmap(lambda xb: feature_extractor_ref(xb, params))(x)

    assert out.shape == (N_GROUPS, BATCH, LATENT_DIM)
    assert bool(jnp.all(jnp.isfinite(out)))
    assert bool(jnp.max(jnp.abs(out - ref)) < 1e-2)

    print("KERNEL_OK")
</pallas_src>

<mosaic_0001>
module attributes {stable_mosaic.version = 11 : i64} {
  func.func @feature_extractor_kernel(%arg0: i32, %arg1: memref<256x32xf32, #tpu.memory_space<vmem>>, %arg2: memref<32x128xf32, #tpu.memory_space<vmem>>, %arg3: memref<1x128xf32, #tpu.memory_space<vmem>>, %arg4: memref<128x128xf32, #tpu.memory_space<vmem>>, %arg5: memref<1x128xf32, #tpu.memory_space<vmem>>, %arg6: memref<128x32xf32, #tpu.memory_space<vmem>>, %arg7: memref<1x32xf32, #tpu.memory_space<vmem>>, %arg8: memref<256x32xf32, #tpu.memory_space<vmem>>) attributes {dimension_semantics = [#tpu.dimension_semantics<parallel>], iteration_bounds = array<i64: 2>, scalar_prefetch = 0 : i64, scratch_operands = 0 : i64, tpu.core_type = #tpu.core_type<tc>, window_params = [{transform_indices = @transform_0, window_bounds = array<i64: 256, 32>}, {pipeline_mode = #tpu.pipeline_mode<synchronous>, transform_indices = @transform_1, window_bounds = array<i64: 32, 128>}, {pipeline_mode = #tpu.pipeline_mode<synchronous>, transform_indices = @transform_2, window_bounds = array<i64: 1, 128>}, {pipeline_mode = #tpu.pipeline_mode<synchronous>, transform_indices = @transform_3, window_bounds = array<i64: 128, 128>}, {pipeline_mode = #tpu.pipeline_mode<synchronous>, transform_indices = @transform_4, window_bounds = array<i64: 1, 128>}, {pipeline_mode = #tpu.pipeline_mode<synchronous>, transform_indices = @transform_5, window_bounds = array<i64: 128, 32>}, {pipeline_mode = #tpu.pipeline_mode<synchronous>, transform_indices = @transform_6, window_bounds = array<i64: 1, 32>}, {transform_indices = @transform_7, window_bounds = array<i64: 256, 32>}]} {
    %c0 = arith.constant 0 : index
    %c0_0 = arith.constant 0 : index
    %0 = vector.load %arg1[%c0, %c0_0] : memref<256x32xf32, #tpu.memory_space<vmem>>, vector<256x32xf32>
    %c0_1 = arith.constant 0 : index
    %c0_2 = arith.constant 0 : index
    %1 = vector.load %arg2[%c0_1, %c0_2] : memref<32x128xf32, #tpu.memory_space<vmem>>, vector<32x128xf32>
    %cst = arith.constant dense<0.000000e+00> : vector<256x128xf32>
    %2 = tpu.matmul %0, %1, %cst {dimension_numbers = #tpu.dot_dimension_numbers<[1], [0], [0], [1], [0, 0, 1, 1], [], []>} : vector<256x32xf32>, vector<32x128xf32>, vector<256x128xf32> -> vector<256x128xf32>
    %c0_3 = arith.constant 0 : index
    %c0_4 = arith.constant 0 : index
    %3 = vector.load %arg3[%c0_3, %c0_4] : memref<1x128xf32, #tpu.memory_space<vmem>>, vector<1x128xf32>
    %4 = vector.broadcast %3 : vector<1x128xf32> to vector<256x128xf32>
    %5 = arith.addf %2, %4 : vector<256x128xf32>
    %6 = vector.shape_cast %5 : vector<256x128xf32> to vector<32x8x128xf32>
    %cst_5 = arith.constant dense<0.000000e+00> : vector<32x128xf32>
    %7 = vector.multi_reduction <add>, %6, %cst_5 [1] : vector<32x8x128xf32> to vector<32x128xf32>
    %8 = vector.shape_cast %7 : vector<32x128xf32> to vector<32x1x128xf32>
    %cst_6 = arith.constant 1.250000e-01 : f32
    %9 = vector.broadcast %cst_6 : f32 to vector<32x1x128xf32>
    %10 = arith.mulf %8, %9 : vector<32x1x128xf32>
    %11 = arith.mulf %6, %6 : vector<32x8x128xf32>
    %cst_7 = arith.constant dense<0.000000e+00> : vector<32x128xf32>
    %12 = vector.multi_reduction <add>, %11, %cst_7 [1] : vector<32x8x128xf32> to vector<32x128xf32>
    %13 = vector.shape_cast %12 : vector<32x128xf32> to vector<32x1x128xf32>
    %cst_8 = arith.constant 1.250000e-01 : f32
    %14 = vector.broadcast %cst_8 : f32 to vector<32x1x128xf32>
    %15 = arith.mulf %13, %14 : vector<32x1x128xf32>
    %16 = arith.mulf %10, %10 : vector<32x1x128xf32>
    %17 = arith.subf %15, %16 : vector<32x1x128xf32>
    %18 = vector.broadcast %10 : vector<32x1x128xf32> to vector<32x8x128xf32>
    %19 = arith.subf %6, %18 : vector<32x8x128xf32>
    %cst_9 = arith.constant 8.000000e-01 : f32
    %20 = vector.broadcast %cst_9 : f32 to vector<32x1x128xf32>
    %21 = arith.addf %17, %20 : vector<32x1x128xf32>
    %22 = math.rsqrt %21 : vector<32x1x128xf32>
    %23 = vector.broadcast %22 : vector<32x1x128xf32> to vector<32x8x128xf32>
    %24 = arith.mulf %19, %23 : vector<32x8x128xf32>
    %25 = vector.shape_cast %24 : vector<32x8x128xf32> to vector<256x128xf32>
    %cst_10 = arith.constant 2.000000e-01 : f32
    %26 = vector.broadcast %cst_10 : f32 to vector<256x128xf32>
    %27 = arith.mulf %26, %25 : vector<256x128xf32>
    %28 = arith.maximumf %25, %27 : vector<256x128xf32>
    %c0_11 = arith.constant 0 : index
    %c0_12 = arith.constant 0 : index
    %29 = vector.load %arg4[%c0_11, %c0_12] : memref<128x128xf32, #tpu.memory_space<vmem>>, vector<128x128xf32>
    %cst_13 = arith.constant dense<0.000000e+00> : vector<256x128xf32>
    %30 = tpu.matmul %28, %29, %cst_13 {dimension_numbers = #tpu.dot_dimension_numbers<[1], [0], [0], [1], [0, 0, 1, 1], [], []>} : vector<256x128xf32>, vector<128x128xf32>, vector<256x128xf32> -> vector<256x128xf32>
    %c0_14 = arith.constant 0 : index
    %c0_15 = arith.constant 0 : index
    %31 = vector.load %arg5[%c0_14, %c0_15] : memref<1x128xf32, #tpu.memory_space<vmem>>, vector<1x128xf32>
    %32 = vector.broadcast %31 : vector<1x128xf32> to vector<256x128xf32>
    %33 = arith.addf %30, %32 : vector<256x128xf32>
    %cst_16 = arith.constant 2.000000e-01 : f32
    %34 = vector.broadcast %cst_16 : f32 to vector<256x128xf32>
    %35 = arith.mulf %34, %33 : vector<256x128xf32>
    %36 = arith.maximumf %33, %35 : vector<256x128xf32>
    %c0_17 = arith.constant 0 : index
    %c0_18 = arith.constant 0 : index
    %37 = vector.load %arg6[%c0_17, %c0_18] : memref<128x32xf32, #tpu.memory_space<vmem>>, vector<128x32xf32>
    %cst_19 = arith.constant dense<0.000000e+00> : vector<256x32xf32>
    %38 = tpu.matmul %36, %37, %cst_19 {dimension_numbers = #tpu.dot_dimension_numbers<[1], [0], [0], [1], [0, 0, 1, 1], [], []>} : vector<256x128xf32>, vector<128x32xf32>, vector<256x32xf32> -> vector<256x32xf32>
    %c0_20 = arith.constant 0 : index
    %c0_21 = arith.constant 0 : index
    %39 = vector.load %arg7[%c0_20, %c0_21] : memref<1x32xf32, #tpu.memory_space<vmem>>, vector<1x32xf32>
    %40 = vector.broadcast %39 : vector<1x32xf32> to vector<256x32xf32>
    %41 = arith.addf %38, %40 : vector<256x32xf32>
    %42 = math.tanh %41 : vector<256x32xf32>
    %c0_22 = arith.constant 0 : index
    %c0_23 = arith.constant 0 : index
    %43 = vector.load %arg8[%c0_22, %c0_23] : memref<256x32xf32, #tpu.memory_space<vmem>>, vector<256x32xf32>
    tpu.vector_store %arg8[%c0_22, %c0_23], %42 {strides = array<i32>} : memref<256x32xf32, #tpu.memory_space<vmem>>, vector<256x32xf32>,
    return
  }
  func.func @transform_0(%arg0: i32) -> (i32, i32) {
    %c0_i32 = arith.constant 0 : i32
    %c0_i32_0 = arith.constant 0 : i32
    return %arg0, %c0_i32 : i32, i32
  }
  func.func @transform_1(%arg0: i32) -> (i32, i32) {
    %c0_i32 = arith.constant 0 : i32
    %c0_i32_0 = arith.constant 0 : i32
    %c0_i32_1 = arith.constant 0 : i32
    return %c0_i32, %c0_i32_0 : i32, i32
  }
  func.func @transform_2(%arg0: i32) -> (i32, i32) {
    %c0_i32 = arith.constant 0 : i32
    %c0_i32_0 = arith.constant 0 : i32
    %c0_i32_1 = arith.constant 0 : i32
    return %c0_i32, %c0_i32_0 : i32, i32
  }
  func.func @transform_3(%arg0: i32) -> (i32, i32) {
    %c0_i32 = arith.constant 0 : i32
    %c0_i32_0 = arith.constant 0 : i32
    %c0_i32_1 = arith.constant 0 : i32
    return %c0_i32, %c0_i32_0 : i32, i32
  }
  func.func @transform_4(%arg0: i32) -> (i32, i32) {
    %c0_i32 = arith.constant 0 : i32
    %c0_i32_0 = arith.constant 0 : i32
    %c0_i32_1 = arith.constant 0 : i32
    return %c0_i32, %c0_i32_0 : i32, i32
  }
  func.func @transform_5(%arg0: i32) -> (i32, i32) {
    %c0_i32 = arith.constant 0 : i32
    %c0_i32_0 = arith.constant 0 : i32
    %c0_i32_1 = arith.constant 0 : i32
    return %c0_i32, %c0_i32_0 : i32, i32
  }
  func.func @transform_6(%arg0: i32) -> (i32, i32) {
    %c0_i32 = arith.constant 0 : i32
    %c0_i32_0 = arith.constant 0 : i32
    %c0_i32_1 = arith.constant 0 : i32
    return %c0_i32, %c0_i32_0 : i32, i32
  }
  func.func @transform_7(%arg0: i32) -> (i32, i32) {
    %c0_i32 = arith.constant 0 : i32
    %c0_i32_0 = arith.constant 0 : i32
    return %arg0, %c0_i32 : i32, i32
  }
}

</mosaic_0001>

<llo_original>
// kernel: feature_extractor_forward.1
$region0: #{feature_extractor_forward.1}
  #allocation0 [shape = 'u32[]', space=smem, size = 0x4, offset = 0x4, fixed_abs, tag = 'smem constant byte address 0x4 - core index']
  #allocation1 [shape = 'u32[72,128]{1,0:T(1,128)}', space=vmem, size = 0x9000, scoped, tag = 'internal scratch']
  %s0 = inlined_call_operand.vmem [shape: f32[512,32], index: 0, kind: input, shape index: {}]
  %s1 = inlined_call_operand.vmem [shape: f32[32,128], index: 1, kind: input, shape index: {}]
  %s2 = inlined_call_operand.vmem [shape: f32[1,128], index: 2, kind: input, shape index: {}]
  %s3 = inlined_call_operand.vmem [shape: f32[128,128], index: 3, kind: input, shape index: {}]
  %s4 = inlined_call_operand.vmem [shape: f32[1,128], index: 4, kind: input, shape index: {}]
  %s5 = inlined_call_operand.vmem [shape: f32[128,32], index: 5, kind: input, shape index: {}]
  %s6 = inlined_call_operand.vmem [shape: f32[1,32], index: 6, kind: input, shape index: {}]
  %s7 = inlined_call_operand.vmem [shape: f32[512,32], index: 7, kind: output, shape index: {}]
  %s8 = sld [smem:[#allocation0]]
  $region61: #{feature_extractor_forward.1} parent=0
    _
  %s10 = ssub.s32 1, %s8
  %s11 = scalar_select 0, %s10, %s8
  loop: start=0, step=1, limit=4
  $region2: #{feature_extractor_forward.1} parent=0 // loop_pre_header
    _
  $region3: #{feature_extractor_forward.1} parent=0 // loop_header
    %s13 = sphi 0, %s17
    %p14 = scmp.ge.s32.totalorder %s13, 4
    %s23 = sphi 0, %s25
    %s26 = sphi 0, %s23
    %s27 = sphi 0, %s26
    %s43 = sphi 0, %s27
    %s47 = sphi 0, %s47
    %s49 = sphi 0, %s47
    %s50 = sphi 0, %s49
    %s64 = sphi 0, %s50
    %s68 = sphi 0, %s68
    %s70 = sphi 0, %s68
    %s71 = sphi 0, %s70
    %s85 = sphi 0, %s71
    %s89 = sphi 0, %s89
    %s91 = sphi 0, %s89
    %s92 = sphi 0, %s91
    %s106 = sphi 0, %s92
    %s110 = sphi 0, %s110
    %s112 = sphi 0, %s110
    %s113 = sphi 0, %s112
    %s127 = sphi 0, %s113
    %s131 = sphi 0, %s131
    %s133 = sphi 0, %s131
    %s134 = sphi 0, %s133
    %s148 = sphi 0, %s134
    %s152 = sphi 0, %s152
    %s154 = sphi 0, %s152
    %s155 = sphi 0, %s154
    %s169 = sphi 0, %s155
    %s175 = sphi 0, %s177
    %s178 = sphi 0, %s175
    %s179 = sphi 0, %s178
    %s195 = sphi 0, %s179
  $region4: #{feature_extractor_forward.1} parent=0 // loop_header_branch
    %16 = sbr.rel (%p14) target = $region8
  $region5: #{feature_extractor_forward.1} parent=0 // loop_body
    %s18 = ssub.s32 %s13, 1
    %s19 = ssub.s32 %s13, 2
    %s20 = sadd.s32 %s13, 1
    %s21 = ssub.s32 %s13, %s20
    %p22 = scmp.eq.s32.totalorder %s21, 0
    %s24 = sadd.s32 %s23, 1
    %s25 = scalar_select %p22, %s23, %s24
    %p28 = pneg %p22
    %p29 = scmp.eq.s32.totalorder %s13, 1
    %p30 = por %p28, %p29
    %p31 = scmp.ne.s32.totalorder %s23, %s26
    %p32 = scmp.eq.s32.totalorder %s13, 0
    %p33 = por %p31, %p32
    %p34 = scmp.ne.s32.totalorder %s23, %s26
    %p35 = scmp.eq.s32.totalorder %s18, 1
    %p36 = por %p34, %p35
    %p37 = scmp.ne.s32.totalorder %s26, %s27
    %p38 = scmp.eq.s32.totalorder %s18, 0
    %p39 = por %p37, %p38
    %p40 = scmp.ne.s32.totalorder %s26, %s27
    %p41 = scmp.eq.s32.totalorder %s19, 1
    %p42 = por %p40, %p41
    %p44 = scmp.ne.s32.totalorder %s27, %s43
    %p45 = scmp.eq.s32.totalorder %s19, 0
    %p46 = por %p44, %p45
    %s48 = sadd.s32 %s47, 1
    %p51 = scmp.eq.s32.totalorder %s13, 1
    %p52 = scmp.ne.s32.totalorder %s47, %s49
    %p53 = scmp.eq.s32.totalorder %s13, 0
    %p54 = por %p52, %p53
    %p55 = scmp.ne.s32.totalorder %s47, %s49
    %p56 = scmp.eq.s32.totalorder %s18, 1
    %p57 = por %p55, %p56
    %p58 = scmp.ne.s32.totalorder %s49, %s50
    %p59 = scmp.eq.s32.totalorder %s18, 0
    %p60 = por %p58, %p59
    %p61 = scmp.ne.s32.totalorder %s49, %s50
    %p62 = scmp.eq.s32.totalorder %s19, 1
    %p63 = por %p61, %p62
    %p65 = scmp.ne.s32.totalorder %s50, %s64
    %p66 = scmp.eq.s32.totalorder %s19, 0
    %p67 = por %p65, %p66
    %s69 = sadd.s32 %s68, 1
    %p72 = scmp.eq.s32.totalorder %s13, 1
    %p73 = scmp.ne.s32.totalorder %s68, %s70
    %p74 = scmp.eq.s32.totalorder %s13, 0
    %p75 = por %p73, %p74
    %p76 = scmp.ne.s32.totalorder %s68, %s70
    %p77 = scmp.eq.s32.totalorder %s18, 1
    %p78 = por %p76, %p77
    %p79 = scmp.ne.s32.totalorder %s70, %s71
    %p80 = scmp.eq.s32.totalorder %s18, 0
    %p81 = por %p79, %p80
    %p82 = scmp.ne.s32.totalorder %s70, %s71
    %p83 = scmp.eq.s32.totalorder %s19, 1
    %p84 = por %p82, %p83
    %p86 = scmp.ne.s32.totalorder %s71, %s85
    %p87 = scmp.eq.s32.totalorder %s19, 0
    %p88 = por %p86, %p87
    %s90 = sadd.s32 %s89, 1
    %p93 = scmp.eq.s32.totalorder %s13, 1
    %p94 = scmp.ne.s32.totalorder %s89, %s91
    %p95 = scmp.eq.s32.totalorder %s13, 0
    %p96 = por %p94, %p95
    %p97 = scmp.ne.s32.totalorder %s89, %s91
    %p98 = scmp.eq.s32.totalorder %s18, 1
    %p99 = por %p97, %p98
    %p100 = scmp.ne.s32.totalorder %s91, %s92
    %p101 = scmp.eq.s32.totalorder %s18, 0
    %p102 = por %p100, %p101
    %p103 = scmp.ne.s32.totalorder %s91, %s92
    %p104 = scmp.eq.s32.totalorder %s19, 1
    %p105 = por %p103, %p104
    %p107 = scmp.ne.s32.totalorder %s92, %s106
    %p108 = scmp.eq.s32.totalorder %s19, 0
    %p109 = por %p107, %p108
    %s111 = sadd.s32 %s110, 1
    %p114 = scmp.eq.s32.totalorder %s13, 1
    %p115 = scmp.ne.s32.totalorder %s110, %s112
    %p116 = scmp.eq.s32.totalorder %s13, 0
    %p117 = por %p115, %p116
    %p118 = scmp.ne.s32.totalorder %s110, %s112
    %p119 = scmp.eq.s32.totalorder %s18, 1
    %p120 = por %p118, %p119
    %p121 = scmp.ne.s32.totalorder %s112, %s113
    %p122 = scmp.eq.s32.totalorder %s18, 0
    %p123 = por %p121, %p122
    %p124 = scmp.ne.s32.totalorder %s112, %s113
    %p125 = scmp.eq.s32.totalorder %s19, 1
    %p126 = por %p124, %p125
    %p128 = scmp.ne.s32.totalorder %s113, %s127
    %p129 = scmp.eq.s32.totalorder %s19, 0
    %p130 = por %p128, %p129
    %s132 = sadd.s32 %s131, 1
    %p135 = scmp.eq.s32.totalorder %s13, 1
    %p136 = scmp.ne.s32.totalorder %s131, %s133
    %p137 = scmp.eq.s32.totalorder %s13, 0
    %p138 = por %p136, %p137
    %p139 = scmp.ne.s32.totalorder %s131, %s133
    %p140 = scmp.eq.s32.totalorder %s18, 1
    %p141 = por %p139, %p140
    %p142 = scmp.ne.s32.totalorder %s133, %s134
    %p143 = scmp.eq.s32.totalorder %s18, 0
    %p144 = por %p142, %p143
    %p145 = scmp.ne.s32.totalorder %s133, %s134
    %p146 = scmp.eq.s32.totalorder %s19, 1
    %p147 = por %p145, %p146
    %p149 = scmp.ne.s32.totalorder %s134, %s148
    %p150 = scmp.eq.s32.totalorder %s19, 0
    %p151 = por %p149, %p150
    %s153 = sadd.s32 %s152, 1
    %p156 = scmp.eq.s32.totalorder %s13, 1
    %p157 = scmp.ne.s32.totalorder %s152, %s154
    %p158 = scmp.eq.s32.totalorder %s13, 0
    %p159 = por %p157, %p158
    %p160 = scmp.ne.s32.totalorder %s152, %s154
    %p161 = scmp.eq.s32.totalorder %s18, 1
    %p162 = por %p160, %p161
    %p163 = scmp.ne.s32.totalorder %s154, %s155
    %p164 = scmp.eq.s32.totalorder %s18, 0
    %p165 = por %p163, %p164
    %p166 = scmp.ne.s32.totalorder %s154, %s155
    %p167 = scmp.eq.s32.totalorder %s19, 1
    %p168 = por %p166, %p167
    %p170 = scmp.ne.s32.totalorder %s155, %s169
    %p171 = scmp.eq.s32.totalorder %s19, 0
    %p172 = por %p170, %p171
    %s173 = ssub.s32 %s13, %s20
    %p174 = scmp.eq.s32.totalorder %s173, 0
    %s176 = sadd.s32 %s175, 1
    %s177 = scalar_select %p174, %s175, %s176
    %p180 = pneg %p174
    %p181 = scmp.eq.s32.totalorder %s13, 1
    %p182 = por %p180, %p181
    %p183 = scmp.ne.s32.totalorder %s175, %s178
    %p184 = scmp.eq.s32.totalorder %s13, 0
    %p185 = por %p183, %p184
    %p186 = scmp.ne.s32.totalorder %s175, %s178
    %p187 = scmp.eq.s32.totalorder %s18, 1
    %p188 = por %p186, %p187
    %p189 = scmp.ne.s32.totalorder %s178, %s179
    %p190 = scmp.eq.s32.totalorder %s18, 0
    %p191 = por %p189, %p190
    %p192 = scmp.ne.s32.totalorder %s178, %s179
    %p193 = scmp.eq.s32.totalorder %s19, 1
    %p194 = por %p192, %p193
    %p196 = scmp.ne.s32.totalorder %s179, %s195
    %p197 = scmp.eq.s32.totalorder %s19, 0
    %p198 = por %p196, %p197
    %p199 = scmp.le.s32.totalorder 1, %s13
    %p200 = scmp.lt.s32.totalorder %s13, 3
    %p201 = pnand %p199, %p200
    %p202 = pneg %p201
    // Predicated region
    $region9: #{feature_extractor_forward.1} parent=5 // pred_check
      _
    $region10: #{feature_extractor_forward.1} parent=5 // pred_check_branch
      %204 = sbr.rel (%p201) target = $region12
    $region11: #{feature_extractor_forward.1} parent=5 // pred_region
      %s205 = ssub.s32 %s13, 1
      // Predicated region
      $region13: #{feature_extractor_forward.1} parent=11 // pred_check
        %p206 = pneg %p60
      $region14: #{feature_extractor_forward.1} parent=11 // pred_check_branch
        %208 = sbr.rel (%p206) target = $region16
      $region15: #{feature_extractor_forward.1} parent=11 // pred_region
        _
      $region16: #{feature_extractor_forward.1} parent=11 // pred_fallthru
        _
      // Predicated region
      $region17: #{feature_extractor_forward.1} parent=11 // pred_check
        %p209 = pneg %p81
      $region18: #{feature_extractor_forward.1} parent=11 // pred_check_branch
        %211 = sbr.rel (%p209) target = $region20
      $region19: #{feature_extractor_forward.1} parent=11 // pred_region
        _
      $region20: #{feature_extractor_forward.1} parent=11 // pred_fallthru
        _
      // Predicated region
      $region21: #{feature_extractor_forward.1} parent=11 // pred_check
        %p212 = pneg %p102
      $region22: #{feature_extractor_forward.1} parent=11 // pred_check_branch
        %214 = sbr.rel (%p212) target = $region24
      $region23: #{feature_extractor_forward.1} parent=11 // pred_region
        _
      $region24: #{feature_extractor_forward.1} parent=11 // pred_fallthru
        _
      // Predicated region
      $region25: #{feature_extractor_forward.1} parent=11 // pred_check
        %p215 = pneg %p123
      $region26: #{feature_extractor_forward.1} parent=11 // pred_check_branch
        %217 = sbr.rel (%p215) target = $region28
      $region27: #{feature_extractor_forward.1} parent=11 // pred_region
        _
      $region28: #{feature_extractor_forward.1} parent=11 // pred_fallthru
        _
      // Predicated region
      $region29: #{feature_extractor_forward.1} parent=11 // pred_check
        %p218 = pneg %p144
      $region30: #{feature_extractor_forward.1} parent=11 // pred_check_branch
        %220 = sbr.rel (%p218) target = $region32
      $region31: #{feature_extractor_forward.1} parent=11 // pred_region
        _
      $region32: #{feature_extractor_forward.1} parent=11 // pred_fallthru
        _
      // Predicated region
      $region33: #{feature_extractor_forward.1} parent=11 // pred_check
        %p221 = pneg %p165
      $region34: #{feature_extractor_forward.1} parent=11 // pred_check_branch
        %223 = sbr.rel (%p221) target = $region36
      $region35: #{feature_extractor_forward.1} parent=11 // pred_region
        _
      $region36: #{feature_extractor_forward.1} parent=11 // pred_fallthru
        _
    $region12: #{feature_extractor_forward.1} parent=5 // pred_fallthru
      _
    %p224 = scmp.lt.s32.totalorder %s13, 2
    // Predicated region
    $region37: #{feature_extractor_forward.1} parent=5 // pred_check
      %p225 = pneg %p224
    $region38: #{feature_extractor_forward.1} parent=5 // pred_check_branch
      %227 = sbr.rel (%p225) target = $region40
    $region39: #{feature_extractor_forward.1} parent=5 // pred_region
      // Predicated region
      $region41: #{feature_extractor_forward.1} parent=39 // pred_check
        %p228 = pneg %p33
      $region42: #{feature_extractor_forward.1} parent=39 // pred_check_branch
        %230 = sbr.rel (%p228) target = $region44
      $region43: #{feature_extractor_forward.1} parent=39 // pred_region
        %s231 = smul.u32 32, %s13
        %p232 = scmp.lt.s32.totalorder %s231, 63
        %s233 = scalar_select %p232, %s231, 63
        %s234 = smul.addr %s233, 8
        %s235 = scalar_lea.vmem %s0, %s234
        %s236 = smul.u32 32, %s13
      $region44: #{feature_extractor_forward.1} parent=39 // pred_fallthru
        _
    $region40: #{feature_extractor_forward.1} parent=5 // pred_fallthru
      _
    %p237 = scmp.le.s32.totalorder 1, %s13
    %p238 = scmp.lt.s32.totalorder %s13, 3
    %p239 = pnand %p237, %p238
    %p240 = pneg %p239
    // Predicated region
    $region45: #{feature_extractor_forward.1} parent=5 // pred_check
      _
    $region46: #{feature_extractor_forward.1} parent=5 // pred_check_branch
      %242 = sbr.rel (%p239) target = $region48
    $region47: #{feature_extractor_forward.1} parent=5 // pred_region
      %s243 = ssub.s32 %s13, 1
      %s244 = smul.u32 32, %s18
      %p245 = scmp.lt.s32.totalorder %s244, 63
      %s246 = scalar_select %p245, %s244, 63
      %s247 = smul.addr %s246, 8
      %s248 = scalar_lea.vmem %s0, %s247
      %p249 = pneg %p39
      %p250 = pneg %p36
      %p251 = pneg %p60
      %p252 = pneg %p57
      %p253 = pneg %p81
      %p254 = pneg %p78
      %p255 = pneg %p102
      %p256 = pneg %p99
      %p257 = pneg %p123
      %p258 = pneg %p120
      %p259 = pneg %p144
      %p260 = pneg %p141
      %p261 = pneg %p165
      %p262 = pneg %p162
      %p263 = pneg %p191
      %p264 = pneg %p188
      %s265 = smul.u32 32, %s18
      %p266 = scmp.lt.s32.totalorder %s265, 63
      %s267 = scalar_select %p266, %s265, 63
      %s268 = smul.addr %s267, 8
      %s269 = scalar_lea.vmem %s7, %s268
      %s270 = smul.u32 32, %s18
      %p271 = scmp.lt.s32.totalorder %s270, 63
      %s272 = scalar_select %p271, %s270, 63
      %s273 = smul.addr %s272, 8
      %s274 = scalar_lea.vmem %s0, %s273
      %s275 = smul.u32 32, %s18
      %s276 = smul.u32 32, %s18
      %p277 = scmp.lt.s32.totalorder %s276, 63
      %s278 = scalar_select %p277, %s276, 63
      %s279 = smul.addr %s278, 8
      %s280 = scalar_lea.vmem %s7, %s279
      %s281 = smul.u32 32, %s18
      %v282 = vld [vmem:[%s274] sm:$0xff]
      %v283 = vld [vmem:[%s274 + $0x8] sm:$0xff]
      %v284 = vld [vmem:[%s274 + $0x10] sm:$0xff]
      %v285 = vld [vmem:[%s274 + $0x18] sm:$0xff]
      %v286 = vld [vmem:[%s274 + $0x20] sm:$0xff]
      %v287 = vld [vmem:[%s274 + $0x28] sm:$0xff]
      %v288 = vld [vmem:[%s274 + $0x30] sm:$0xff]
      %v289 = vld [vmem:[%s274 + $0x38] sm:$0xff]
      %v290 = vld [vmem:[%s274 + $0x40] sm:$0xff]
      %v291 = vld [vmem:[%s274 + $0x48] sm:$0xff]
      %v292 = vld [vmem:[%s274 + $0x50] sm:$0xff]
      %v293 = vld [vmem:[%s274 + $0x58] sm:$0xff]
      %v294 = vld [vmem:[%s274 + $0x60] sm:$0xff]
      %v295 = vld [vmem:[%s274 + $0x68] sm:$0xff]
      %v296 = vld [vmem:[%s274 + $0x70] sm:$0xff]
      %v297 = vld [vmem:[%s274 + $0x78] sm:$0xff]
      %v298 = vld [vmem:[%s274 + $0x80] sm:$0xff]
      %v299 = vld [vmem:[%s274 + $0x88] sm:$0xff]
      %v300 = vld [vmem:[%s274 + $0x90] sm:$0xff]
      %v301 = vld [vmem:[%s274 + $0x98] sm:$0xff]
      %v302 = vld [vmem:[%s274 + $0xa0] sm:$0xff]
      %v303 = vld [vmem:[%s274 + $0xa8] sm:$0xff]
      %v304 = vld [vmem:[%s274 + $0xb0] sm:$0xff]
      %v305 = vld [vmem:[%s274 + $0xb8] sm:$0xff]
      %v306 = vld [vmem:[%s274 + $0xc0] sm:$0xff]
      %v307 = vld [vmem:[%s274 + $0xc8] sm:$0xff]
      %v308 = vld [vmem:[%s274 + $0xd0] sm:$0xff]
      %v309 = vld [vmem:[%s274 + $0xd8] sm:$0xff]
      %v310 = vld [vmem:[%s274 + $0xe0] sm:$0xff]
      %v311 = vld [vmem:[%s274 + $0xe8] sm:$0xff]
      %v312 = vld [vmem:[%s274 + $0xf0] sm:$0xff]
      %v313 = vld [vmem:[%s274 + $0xf8] sm:$0xff]
      %v314 = vld [vmem:[%s1] sm:$0xff]
      %v315 = vld [vmem:[%s1 + $0x8] sm:$0xff]
      %v316 = vld [vmem:[%s1 + $0x10] sm:$0xff]
      %v317 = vld [vmem:[%s1 + $0x18] sm:$0xff]
      %v318 = vld [vmem:[%s2] sm:$0x1]
      %v320 = vperm.slane %v318, 0
      %vm322 = vcmask 261120
      %v324 = vsel %vm322, %v282, 0
      %v327 = vsel %vm322, %v283, 0
      %v330 = vsel %vm322, %v284, 0
      %v333 = vsel %vm322, %v285, 0
      %v336 = vsel %vm322, %v286, 0
      %v339 = vsel %vm322, %v287, 0
      %v342 = vsel %vm322, %v288, 0
      %v345 = vsel %vm322, %v289, 0
      %v348 = vsel %vm322, %v290, 0
      %v351 = vsel %vm322, %v291, 0
      %v354 = vsel %vm322, %v292, 0
      %v357 = vsel %vm322, %v293, 0
      %v360 = vsel %vm322, %v294, 0
      %v363 = vsel %vm322, %v295, 0
      %v366 = vsel %vm322, %v296, 0
      %v369 = vsel %vm322, %v297, 0
      %v372 = vsel %vm322, %v298, 0
      %v375 = vsel %vm322, %v299, 0
      %v378 = vsel %vm322, %v300, 0
      %v381 = vsel %vm322, %v301, 0
      %v384 = vsel %vm322, %v302, 0
      %v387 = vsel %vm322, %v303, 0
      %v390 = vsel %vm322, %v304, 0
      %v393 = vsel %vm322, %v305, 0
      %v396 = vsel %vm322, %v306, 0
      %v399 = vsel %vm322, %v307, 0
      %v402 = vsel %vm322, %v308, 0
      %v405 = vsel %vm322, %v309, 0
      %v408 = vsel %vm322, %v310, 0
      %v411 = vsel %vm322, %v311, 0
      %v414 = vsel %vm322, %v312, 0
      %v417 = vsel %vm322, %v313, 0
      %419 = vmatpush.msra.mxu0 0.0
      %420 = vmatpush.msra.mxu0 0.0
      %421 = vmatpush.msra.mxu0 0.0
      %422 = vmatpush.msra.mxu0 0.0
      %423 = vmatpush.msra.mxu0 0.0
      %424 = vmatpush.msra.mxu0 0.0
      %425 = vmatpush.msra.mxu0 0.0
      %426 = vmatpush.msra.mxu0 0.0
      %427 = vmatpush.msra.mxu0 0.0
      %428 = vmatpush.msra.mxu0 0.0
      %429 = vmatpush.msra.mxu0 0.0
      %430 = vmatpush.msra.mxu0 0.0
      %431 = vmatpush.msra.mxu0 %v317
      %432 = vmatpush.msra.mxu0 %v316
      %433 = vmatpush.msra.mxu0 %v315
      %434 = vmatpush.msra.mxu0 %v314
      %435 = vmatmul.f32.gmra.mxu0 %v324
      %v436 = vpop.f32.mrf.mxu0
      %v437 = vadd.f32 %v320, %v436
      %438 = vmatmul.f32.gmra.mxu0 %v327
      %v439 = vpop.f32.mrf.mxu0
      %v440 = vadd.f32 %v320, %v439
      %441 = vmatmul.f32.gmra.mxu0 %v330
      %v442 = vpop.f32.mrf.mxu0
      %v443 = vadd.f32 %v320, %v442
      %444 = vmatmul.f32.gmra.mxu0 %v333
      %v445 = vpop.f32.mrf.mxu0
      %v446 = vadd.f32 %v320, %v445
      %447 = vmatmul.f32.gmra.mxu0 %v336
      %v448 = vpop.f32.mrf.mxu0
      %v449 = vadd.f32 %v320, %v448
      %450 = vmatmul.f32.gmra.mxu0 %v339
      %v451 = vpop.f32.mrf.mxu0
      %v452 = vadd.f32 %v320, %v451
      %453 = vmatmul.f32.gmra.mxu0 %v342
      %v454 = vpop.f32.mrf.mxu0
      %v455 = vadd.f32 %v320, %v454
      %456 = vmatmul.f32.gmra.mxu0 %v345
      %v457 = vpop.f32.mrf.mxu0
      %v458 = vadd.f32 %v320, %v457
      %459 = vmatmul.f32.gmra.mxu0 %v348
      %v460 = vpop.f32.mrf.mxu0
      %v461 = vadd.f32 %v320, %v460
      %462 = vmatmul.f32.gmra.mxu0 %v351
      %v463 = vpop.f32.mrf.mxu0
      %v464 = vadd.f32 %v320, %v463
      %465 = vmatmul.f32.gmra.mxu0 %v354
      %v466 = vpop.f32.mrf.mxu0
      %v467 = vadd.f32 %v320, %v466
      %468 = vmatmul.f32.gmra.mxu0 %v357
      %v469 = vpop.f32.mrf.mxu0
      %v470 = vadd.f32 %v320, %v469
      %471 = vmatmul.f32.gmra.mxu0 %v360
      %v472 = vpop.f32.mrf.mxu0
      %v473 = vadd.f32 %v320, %v472
      %474 = vmatmul.f32.gmra.mxu0 %v363
      %v475 = vpop.f32.mrf.mxu0
      %v476 = vadd.f32 %v320, %v475
      %477 = vmatmul.f32.gmra.mxu0 %v366
      %v478 = vpop.f32.mrf.mxu0
      %v479 = vadd.f32 %v320, %v478
      %480 = vmatmul.f32.gmra.mxu0 %v369
      %v481 = vpop.f32.mrf.mxu0
      %v482 = vadd.f32 %v320, %v481
      %483 = vmatmul.f32.gmra.mxu0 %v372
      %v484 = vpop.f32.mrf.mxu0
      %v485 = vadd.f32 %v320, %v484
      %486 = vmatmul.f32.gmra.mxu0 %v375
      %v487 = vpop.f32.mrf.mxu0
      %v488 = vadd.f32 %v320, %v487
      %489 = vmatmul.f32.gmra.mxu0 %v378
      %v490 = vpop.f32.mrf.mxu0
      %v491 = vadd.f32 %v320, %v490
      %492 = vmatmul.f32.gmra.mxu0 %v381
      %v493 = vpop.f32.mrf.mxu0
      %v494 = vadd.f32 %v320, %v493
      %495 = vmatmul.f32.gmra.mxu0 %v384
      %v496 = vpop.f32.mrf.mxu0
      %v497 = vadd.f32 %v320, %v496
      %498 = vmatmul.f32.gmra.mxu0 %v387
      %v499 = vpop.f32.mrf.mxu0
      %v500 = vadd.f32 %v320, %v499
      %501 = vmatmul.f32.gmra.mxu0 %v390
      %v502 = vpop.f32.mrf.mxu0
      %v503 = vadd.f32 %v320, %v502
      %504 = vmatmul.f32.gmra.mxu0 %v393
      %v505 = vpop.f32.mrf.mxu0
      %v506 = vadd.f32 %v320, %v505
      %507 = vmatmul.f32.gmra.mxu0 %v396
      %v508 = vpop.f32.mrf.mxu0
      %v509 = vadd.f32 %v320, %v508
      %510 = vmatmul.f32.gmra.mxu0 %v399
      %v511 = vpop.f32.mrf.mxu0
      %v512 = vadd.f32 %v320, %v511
      %513 = vmatmul.f32.gmra.mxu0 %v402
      %v514 = vpop.f32.mrf.mxu0
      %v515 = vadd.f32 %v320, %v514
      %516 = vmatmul.f32.gmra.mxu0 %v405
      %v517 = vpop.f32.mrf.mxu0
      %v518 = vadd.f32 %v320, %v517
      %519 = vmatmul.f32.gmra.mxu0 %v408
      %v520 = vpop.f32.mrf.mxu0
      %v521 = vadd.f32 %v320, %v520
      %522 = vmatmul.f32.gmra.mxu0 %v411
      %v523 = vpop.f32.mrf.mxu0
      %v524 = vadd.f32 %v320, %v523
      %525 = vmatmul.f32.gmra.mxu0 %v414
      %v526 = vpop.f32.mrf.mxu0
      %v527 = vadd.f32 %v320, %v526
      %528 = vmatmul.f32.gmra.mxu0 %v417
      %v529 = vpop.f32.mrf.mxu0
      %v530 = vadd.f32 %v320, %v529
      %531 = vdwg.mxu0
      %v532 = vrot.slane %v437, 4
      %v533 = vadd.f32 %v437, %v532
      %v534 = vrot.slane %v533, 2
      %v535 = vadd.f32 %v533, %v534
      %v536 = vrot.slane %v535, 1
      %v537 = vadd.f32 %v535, %v536
      %v538 = vrot.slane %v440, 4
      %v539 = vadd.f32 %v440, %v538
      %v540 = vrot.slane %v539, 2
      %v541 = vadd.f32 %v539, %v540
      %v542 = vrot.slane %v541, 1
      %v543 = vadd.f32 %v541, %v542
      %v544 = vrot.slane %v443, 4
      %v545 = vadd.f32 %v443, %v544
      %v546 = vrot.slane %v545, 2
      %v547 = vadd.f32 %v545, %v546
      %v548 = vrot.slane %v547, 1
      %v549 = vadd.f32 %v547, %v548
      %v550 = vrot.slane %v446, 4
      %v551 = vadd.f32 %v446, %v550
      %v552 = vrot.slane %v551, 2
      %v553 = vadd.f32 %v551, %v552
      %v554 = vrot.slane %v553, 1
      %v555 = vadd.f32 %v553, %v554
      %v556 = vrot.slane %v449, 4
      %v557 = vadd.f32 %v449, %v556
      %v558 = vrot.slane %v557, 2
      %v559 = vadd.f32 %v557, %v558
      %v560 = vrot.slane %v559, 1
      %v561 = vadd.f32 %v559, %v560
      %v562 = vrot.slane %v452, 4
      %v563 = vadd.f32 %v452, %v562
      %v564 = vrot.slane %v563, 2
      %v565 = vadd.f32 %v563, %v564
      %v566 = vrot.slane %v565, 1
      %v567 = vadd.f32 %v565, %v566
      %v568 = vrot.slane %v455, 4
      %v569 = vadd.f32 %v455, %v568
      %v570 = vrot.slane %v569, 2
      %v571 = vadd.f32 %v569, %v570
      %v572 = vrot.slane %v571, 1
      %v573 = vadd.f32 %v571, %v572
      %v574 = vrot.slane %v458, 4
      %v575 = vadd.f32 %v458, %v574
      %v576 = vrot.slane %v575, 2
      %v577 = vadd.f32 %v575, %v576
      %v578 = vrot.slane %v577, 1
      %v579 = vadd.f32 %v577, %v578
      %v580 = vrot.slane %v461, 4
      %v581 = vadd.f32 %v461, %v580
      %v582 = vrot.slane %v581, 2
      %v583 = vadd.f32 %v581, %v582
      %v584 = vrot.slane %v583, 1
      %v585 = vadd.f32 %v583, %v584
      %v586 = vrot.slane %v464, 4
      %v587 = vadd.f32 %v464, %v586
      %v588 = vrot.slane %v587, 2
      %v589 = vadd.f32 %v587, %v588
      %v590 = vrot.slane %v589, 1
      %v591 = vadd.f32 %v589, %v590
      %v592 = vrot.slane %v467, 4
      %v593 = vadd.f32 %v467, %v592
      %v594 = vrot.slane %v593, 2
      %v595 = vadd.f32 %v593, %v594
      %v596 = vrot.slane %v595, 1
      %v597 = vadd.f32 %v595, %v596
      %v598 = vrot.slane %v470, 4
      %v599 = vadd.f32 %v470, %v598
      %v600 = vrot.slane %v599, 2
      %v601 = vadd.f32 %v599, %v600
      %v602 = vrot.slane %v601, 1
      %v603 = vadd.f32 %v601, %v602
      %v604 = vrot.slane %v473, 4
      %v605 = vadd.f32 %v473, %v604
      %v606 = vrot.slane %v605, 2
      %v607 = vadd.f32 %v605, %v606
      %v608 = vrot.slane %v607, 1
      %v609 = vadd.f32 %v607, %v608
      %v610 = vrot.slane %v476, 4
      %v611 = vadd.f32 %v476, %v610
      %v612 = vrot.slane %v611, 2
      %v613 = vadd.f32 %v611, %v612
      %v614 = vrot.slane %v613, 1
      %v615 = vadd.f32 %v613, %v614
      %v616 = vrot.slane %v479, 4
      %v617 = vadd.f32 %v479, %v616
      %v618 = vrot.slane %v617, 2
      %v619 = vadd.f32 %v617, %v618
      %v620 = vrot.slane %v619, 1
      %v621 = vadd.f32 %v619, %v620
      %v622 = vrot.slane %v482, 4
      %v623 = vadd.f32 %v482, %v622
      %v624 = vrot.slane %v623, 2
      %v625 = vadd.f32 %v623, %v624
      %v626 = vrot.slane %v625, 1
      %v627 = vadd.f32 %v625, %v626
      %v628 = vrot.slane %v485, 4
      %v629 = vadd.f32 %v485, %v628
      %v630 = vrot.slane %v629, 2
      %v631 = vadd.f32 %v629, %v630
      %v632 = vrot.slane %v631, 1
      %v633 = vadd.f32 %v631, %v632
      %v634 = vrot.slane %v488, 4
      %v635 = vadd.f32 %v488, %v634
      %v636 = vrot.slane %v635, 2
      %v637 = vadd.f32 %v635, %v636
      %v638 = vrot.slane %v637, 1
      %v639 = vadd.f32 %v637, %v638
      %v640 = vrot.slane %v491, 4
      %v641 = vadd.f32 %v491, %v640
      %v642 = vrot.slane %v641, 2
      %v643 = vadd.f32 %v641, %v642
      %v644 = vrot.slane %v643, 1
      %v645 = vadd.f32 %v643, %v644
      %v646 = vrot.slane %v494, 4
      %v647 = vadd.f32 %v494, %v646
      %v648 = vrot.slane %v647, 2
      %v649 = vadd.f32 %v647, %v648
      %v650 = vrot.slane %v649, 1
      %v651 = vadd.f32 %v649, %v650
      %v652 = vrot.slane %v497, 4
      %v653 = vadd.f32 %v497, %v652
      %v654 = vrot.slane %v653, 2
      %v655 = vadd.f32 %v653, %v654
      %v656 = vrot.slane %v655, 1
      %v657 = vadd.f32 %v655, %v656
      %v658 = vrot.slane %v500, 4
      %v659 = vadd.f32 %v500, %v658
      %v660 = vrot.slane %v659, 2
      %v661 = vadd.f32 %v659, %v660
      %v662 = vrot.slane %v661, 1
      %v663 = vadd.f32 %v661, %v662
      %v664 = vrot.slane %v503, 4
      %v665 = vadd.f32 %v503, %v664
      %v666 = vrot.slane %v665, 2
      %v667 = vadd.f32 %v665, %v666
      %v668 = vrot.slane %v667, 1
      %v669 = vadd.f32 %v667, %v668
      %v670 = vrot.slane %v506, 4
      %v671 = vadd.f32 %v506, %v670
      %v672 = vrot.slane %v671, 2
      %v673 = vadd.f32 %v671, %v672
      %v674 = vrot.slane %v673, 1
      %v675 = vadd.f32 %v673, %v674
      %v676 = vrot.slane %v509, 4
      %v677 = vadd.f32 %v509, %v676
      %v678 = vrot.slane %v677, 2
      %v679 = vadd.f32 %v677, %v678
      %v680 = vrot.slane %v679, 1
      %v681 = vadd.f32 %v679, %v680
      %v682 = vrot.slane %v512, 4
      %v683 = vadd.f32 %v512, %v682
      %v684 = vrot.slane %v683, 2
      %v685 = vadd.f32 %v683, %v684
      %v686 = vrot.slane %v685, 1
      %v687 = vadd.f32 %v685, %v686
      %v688 = vrot.slane %v515, 4
      %v689 = vadd.f32 %v515, %v688
      %v690 = vrot.slane %v689, 2
      %v691 = vadd.f32 %v689, %v690
      %v692 = vrot.slane %v691, 1
      %v693 = vadd.f32 %v691, %v692
      %v694 = vrot.slane %v518, 4
      %v695 = vadd.f32 %v518, %v694
      %v696 = vrot.slane %v695, 2
      %v697 = vadd.f32 %v695, %v696
      %v698 = vrot.slane %v697, 1
      %v699 = vadd.f32 %v697, %v698
      %v700 = vrot.slane %v521, 4
      %v701 = vadd.f32 %v521, %v700
      %v702 = vrot.slane %v701, 2
      %v703 = vadd.f32 %v701, %v702
      %v704 = vrot.slane %v703, 1
      %v705 = vadd.f32 %v703, %v704
      %v706 = vrot.slane %v524, 4
      %v707 = vadd.f32 %v524, %v706
      %v708 = vrot.slane %v707, 2
      %v709 = vadd.f32 %v707, %v708
      %v710 = vrot.slane %v709, 1
      %v711 = vadd.f32 %v709, %v710
      %v712 = vrot.slane %v527, 4
      %v713 = vadd.f32 %v527, %v712
      %v714 = vrot.slane %v713, 2
      %v715 = vadd.f32 %v713, %v714
      %v716 = vrot.slane %v715, 1
      %v717 = vadd.f32 %v715, %v716
      %v718 = vrot.slane %v530, 4
      %v719 = vadd.f32 %v530, %v718
      %v720 = vrot.slane %v719, 2
      %v721 = vadd.f32 %v719, %v720
      %v722 = vrot.slane %v721, 1
      %v723 = vadd.f32 %v721, %v722
      %v724 = vmul.f32 %v537, 0.125
      %v725 = vmul.f32 %v543, 0.125
      %v726 = vmul.f32 %v549, 0.125
      %v727 = vmul.f32 %v555, 0.125
      %v728 = vmul.f32 %v561, 0.125
      %v729 = vmul.f32 %v567, 0.125
      %v730 = vmul.f32 %v573, 0.125
      %v731 = vmul.f32 %v579, 0.125
      %v732 = vmul.f32 %v585, 0.125
      %v733 = vmul.f32 %v591, 0.125
      %v734 = vmul.f32 %v597, 0.125
      %v735 = vmul.f32 %v603, 0.125
      %v736 = vmul.f32 %v609, 0.125
      %v737 = vmul.f32 %v615, 0.125
      %v738 = vmul.f32 %v621, 0.125
      %v739 = vmul.f32 %v627, 0.125
      %v740 = vmul.f32 %v633, 0.125
      %v741 = vmul.f32 %v639, 0.125
      %v742 = vmul.f32 %v645, 0.125
      %v743 = vmul.f32 %v651, 0.125
      %v744 = vmul.f32 %v657, 0.125
      %v745 = vmul.f32 %v663, 0.125
      %v746 = vmul.f32 %v669, 0.125
      %v747 = vmul.f32 %v675, 0.125
      %v748 = vmul.f32 %v681, 0.125
      %v749 = vmul.f32 %v687, 0.125
      %v750 = vmul.f32 %v693, 0.125
      %v751 = vmul.f32 %v699, 0.125
      %v752 = vmul.f32 %v705, 0.125
      %v753 = vmul.f32 %v711, 0.125
      %v754 = vmul.f32 %v717, 0.125
      %v755 = vmul.f32 %v723, 0.125
      %v756 = vmul.f32 %v437, %v437
      %v757 = vmul.f32 %v440, %v440
      %v758 = vmul.f32 %v443, %v443
      %v759 = vmul.f32 %v446, %v446
      %v760 = vmul.f32 %v449, %v449
      %v761 = vmul.f32 %v452, %v452
      %v762 = vmul.f32 %v455, %v455
      %v763 = vmul.f32 %v458, %v458
      %v764 = vmul.f32 %v461, %v461
      %v765 = vmul.f32 %v464, %v464
      %v766 = vmul.f32 %v467, %v467
      %v767 = vmul.f32 %v470, %v470
      %v768 = vmul.f32 %v473, %v473
      %v769 = vmul.f32 %v476, %v476
      %v770 = vmul.f32 %v479, %v479
      %v771 = vmul.f32 %v482, %v482
      %v772 = vmul.f32 %v485, %v485
      %v773 = vmul.f32 %v488, %v488
      %v774 = vmul.f32 %v491, %v491
      %v775 = vmul.f32 %v494, %v494
      %v776 = vmul.f32 %v497, %v497
      %v777 = vmul.f32 %v500, %v500
      %v778 = vmul.f32 %v503, %v503
      %v779 = vmul.f32 %v506, %v506
      %v780 = vmul.f32 %v509, %v509
      %v781 = vmul.f32 %v512, %v512
      %v782 = vmul.f32 %v515, %v515
      %v783 = vmul.f32 %v518, %v518
      %v784 = vmul.f32 %v521, %v521
      %v785 = vmul.f32 %v524, %v524
      %v786 = vmul.f32 %v527, %v527
      %v787 = vmul.f32 %v530, %v530
      %v788 = vrot.slane %v756, 4
      %v789 = vadd.f32 %v756, %v788
      %v790 = vrot.slane %v789, 2
      %v791 = vadd.f32 %v789, %v790
      %v792 = vrot.slane %v791, 1
      %v793 = vadd.f32 %v791, %v792
      %v794 = vrot.slane %v757, 4
      %v795 = vadd.f32 %v757, %v794
      %v796 = vrot.slane %v795, 2
      %v797 = vadd.f32 %v795, %v796
      %v798 = vrot.slane %v797, 1
      %v799 = vadd.f32 %v797, %v798
      %v800 = vrot.slane %v758, 4
      %v801 = vadd.f32 %v758, %v800
      %v802 = vrot.slane %v801, 2
      %v803 = vadd.f32 %v801, %v802
      %v804 = vrot.slane %v803, 1
      %v805 = vadd.f32 %v803, %v804
      %v806 = vrot.slane %v759, 4
      %v807 = vadd.f32 %v759, %v806
      %v808 = vrot.slane %v807, 2
      %v809 = vadd.f32 %v807, %v808
      %v810 = vrot.slane %v809, 1
      %v811 = vadd.f32 %v809, %v810
      %v812 = vrot.slane %v760, 4
      %v813 = vadd.f32 %v760, %v812
      %v814 = vrot.slane %v813, 2
      %v815 = vadd.f32 %v813, %v814
      %v816 = vrot.slane %v815, 1
      %v817 = vadd.f32 %v815, %v816
      %v818 = vrot.slane %v761, 4
      %v819 = vadd.f32 %v761, %v818
      %v820 = vrot.slane %v819, 2
      %v821 = vadd.f32 %v819, %v820
      %v822 = vrot.slane %v821, 1
      %v823 = vadd.f32 %v821, %v822
      %v824 = vrot.slane %v762, 4
      %v825 = vadd.f32 %v762, %v824
      %v826 = vrot.slane %v825, 2
      %v827 = vadd.f32 %v825, %v826
      %v828 = vrot.slane %v827, 1
      %v829 = vadd.f32 %v827, %v828
      %v830 = vrot.slane %v763, 4
      %v831 = vadd.f32 %v763, %v830
      %v832 = vrot.slane %v831, 2
      %v833 = vadd.f32 %v831, %v832
      %v834 = vrot.slane %v833, 1
      %v835 = vadd.f32 %v833, %v834
      %v836 = vrot.slane %v764, 4
      %v837 = vadd.f32 %v764, %v836
      %v838 = vrot.slane %v837, 2
      %v839 = vadd.f32 %v837, %v838
      %v840 = vrot.slane %v839, 1
      %v841 = vadd.f32 %v839, %v840
      %v842 = vrot.slane %v765, 4
      %v843 = vadd.f32 %v765, %v842
      %v844 = vrot.slane %v843, 2
      %v845 = vadd.f32 %v843, %v844
      %v846 = vrot.slane %v845, 1
      %v847 = vadd.f32 %v845, %v846
      %v848 = vrot.slane %v766, 4
      %v849 = vadd.f32 %v766, %v848
      %v850 = vrot.slane %v849, 2
      %v851 = vadd.f32 %v849, %v850
      %v852 = vrot.slane %v851, 1
      %v853 = vadd.f32 %v851, %v852
      %v854 = vrot.slane %v767, 4
      %v855 = vadd.f32 %v767, %v854
      %v856 = vrot.slane %v855, 2
      %v857 = vadd.f32 %v855, %v856
      %v858 = vrot.slane %v857, 1
      %v859 = vadd.f32 %v857, %v858
      %v860 = vrot.slane %v768, 4
      %v861 = vadd.f32 %v768, %v860
      %v862 = vrot.slane %v861, 2
      %v863 = vadd.f32 %v861, %v862
      %v864 = vrot.slane %v863, 1
      %v865 = vadd.f32 %v863, %v864
      %v866 = vrot.slane %v769, 4
      %v867 = vadd.f32 %v769, %v866
      %v868 = vrot.slane %v867, 2
      %v869 = vadd.f32 %v867, %v868
      %v870 = vrot.slane %v869, 1
      %v871 = vadd.f32 %v869, %v870
      %v872 = vrot.slane %v770, 4
      %v873 = vadd.f32 %v770, %v872
      %v874 = vrot.slane %v873, 2
      %v875 = vadd.f32 %v873, %v874
      %v876 = vrot.slane %v875, 1
      %v877 = vadd.f32 %v875, %v876
      %v878 = vrot.slane %v771, 4
      %v879 = vadd.f32 %v771, %v878
      %v880 = vrot.slane %v879, 2
      %v881 = vadd.f32 %v879, %v880
      %v882 = vrot.slane %v881, 1
      %v883 = vadd.f32 %v881, %v882
      %v884 = vrot.slane %v772, 4
      %v885 = vadd.f32 %v772, %v884
      %v886 = vrot.slane %v885, 2
      %v887 = vadd.f32 %v885, %v886
      %v888 = vrot.slane %v887, 1
      %v889 = vadd.f32 %v887, %v888
      %v890 = vrot.slane %v773, 4
      %v891 = vadd.f32 %v773, %v890
      %v892 = vrot.slane %v891, 2
      %v893 = vadd.f32 %v891, %v892
      %v894 = vrot.slane %v893, 1
      %v895 = vadd.f32 %v893, %v894
      %v896 = vrot.slane %v774, 4
      %v897 = vadd.f32 %v774, %v896
      %v898 = vrot.slane %v897, 2
      %v899 = vadd.f32 %v897, %v898
      %v900 = vrot.slane %v899, 1
      %v901 = vadd.f32 %v899, %v900
      %v902 = vrot.slane %v775, 4
      %v903 = vadd.f32 %v775, %v902
      %v904 = vrot.slane %v903, 2
      %v905 = vadd.f32 %v903, %v904
      %v906 = vrot.slane %v905, 1
      %v907 = vadd.f32 %v905, %v906
      %v908 = vrot.slane %v776, 4
      %v909 = vadd.f32 %v776, %v908
      %v910 = vrot.slane %v909, 2
      %v911 = vadd.f32 %v909, %v910
      %v912 = vrot.slane %v911, 1
      %v913 = vadd.f32 %v911, %v912
      %v914 = vrot.slane %v777, 4
      %v915 = vadd.f32 %v777, %v914
      %v916 = vrot.slane %v915, 2
      %v917 = vadd.f32 %v915, %v916
      %v918 = vrot.slane %v917, 1
      %v919 = vadd.f32 %v917, %v918
      %v920 = vrot.slane %v778, 4
      %v921 = vadd.f32 %v778, %v920
      %v922 = vrot.slane %v921, 2
      %v923 = vadd.f32 %v921, %v922
      %v924 = vrot.slane %v923, 1
      %v925 = vadd.f32 %v923, %v924
      %v926 = vrot.slane %v779, 4
      %v927 = vadd.f32 %v779, %v926
      %v928 = vrot.slane %v927, 2
      %v929 = vadd.f32 %v927, %v928
      %v930 = vrot.slane %v929, 1
      %v931 = vadd.f32 %v929, %v930
      %v932 = vrot.slane %v780, 4
      %v933 = vadd.f32 %v780, %v932
      %v934 = vrot.slane %v933, 2
      %v935 = vadd.f32 %v933, %v934
      %v936 = vrot.slane %v935, 1
      %v937 = vadd.f32 %v935, %v936
      %v938 = vrot.slane %v781, 4
      %v939 = vadd.f32 %v781, %v938
      %v940 = vrot.slane %v939, 2
      %v941 = vadd.f32 %v939, %v940
      %v942 = vrot.slane %v941, 1
      %v943 = vadd.f32 %v941, %v942
      %v944 = vrot.slane %v782, 4
      %v945 = vadd.f32 %v782, %v944
      %v946 = vrot.slane %v945, 2
      %v947 = vadd.f32 %v945, %v946
      %v948 = vrot.slane %v947, 1
      %v949 = vadd.f32 %v947, %v948
      %v950 = vrot.slane %v783, 4
      %v951 = vadd.f32 %v783, %v950
      %v952 = vrot.slane %v951, 2
      %v953 = vadd.f32 %v951, %v952
      %v954 = vrot.slane %v953, 1
      %v955 = vadd.f32 %v953, %v954
      %v956 = vrot.slane %v784, 4
      %v957 = vadd.f32 %v784, %v956
      %v958 = vrot.slane %v957, 2
      %v959 = vadd.f32 %v957, %v958
      %v960 = vrot.slane %v959, 1
      %v961 = vadd.f32 %v959, %v960
      %v962 = vrot.slane %v785, 4
      %v963 = vadd.f32 %v785, %v962
      %v964 = vrot.slane %v963, 2
      %v965 = vadd.f32 %v963, %v964
      %v966 = vrot.slane %v965, 1
      %v967 = vadd.f32 %v965, %v966
      %v968 = vrot.slane %v786, 4
      %v969 = vadd.f32 %v786, %v968
      %v970 = vrot.slane %v969, 2
      %v971 = vadd.f32 %v969, %v970
      %v972 = vrot.slane %v971, 1
      %v973 = vadd.f32 %v971, %v972
      %v974 = vrot.slane %v787, 4
      %v975 = vadd.f32 %v787, %v974
      %v976 = vrot.slane %v975, 2
      %v977 = vadd.f32 %v975, %v976
      %v978 = vrot.slane %v977, 1
      %v979 = vadd.f32 %v977, %v978
      %v980 = vmul.f32 %v793, 0.125
      %v981 = vmul.f32 %v799, 0.125
      %v982 = vmul.f32 %v805, 0.125
      %v983 = vmul.f32 %v811, 0.125
      %v984 = vmul.f32 %v817, 0.125
      %v985 = vmul.f32 %v823, 0.125
      %v986 = vmul.f32 %v829, 0.125
      %v987 = vmul.f32 %v835, 0.125
      %v988 = vmul.f32 %v841, 0.125
      %v989 = vmul.f32 %v847, 0.125
      %v990 = vmul.f32 %v853, 0.125
      %v991 = vmul.f32 %v859, 0.125
      %v992 = vmul.f32 %v865, 0.125
      %v993 = vmul.f32 %v871, 0.125
      %v994 = vmul.f32 %v877, 0.125
      %v995 = vmul.f32 %v883, 0.125
      %v996 = vmul.f32 %v889, 0.125
      %v997 = vmul.f32 %v895, 0.125
      %v998 = vmul.f32 %v901, 0.125
      %v999 = vmul.f32 %v907, 0.125
      %v1000 = vmul.f32 %v913, 0.125
      %v1001 = vmul.f32 %v919, 0.125
      %v1002 = vmul.f32 %v925, 0.125
      %v1003 = vmul.f32 %v931, 0.125
      %v1004 = vmul.f32 %v937, 0.125
      %v1005 = vmul.f32 %v943, 0.125
      %v1006 = vmul.f32 %v949, 0.125
      %v1007 = vmul.f32 %v955, 0.125
      %v1008 = vmul.f32 %v961, 0.125
      %v1009 = vmul.f32 %v967, 0.125
      %v1010 = vmul.f32 %v973, 0.125
      %v1011 = vmul.f32 %v979, 0.125
      %v1012 = vmul.f32 %v724, %v724
      %v1013 = vmul.f32 %v725, %v725
      %v1014 = vmul.f32 %v726, %v726
      %v1015 = vmul.f32 %v727, %v727
      %v1016 = vmul.f32 %v728, %v728
      %v1017 = vmul.f32 %v729, %v729
      %v1018 = vmul.f32 %v730, %v730
      %v1019 = vmul.f32 %v731, %v731
      %v1020 = vmul.f32 %v732, %v732
      %v1021 = vmul.f32 %v733, %v733
      %v1022 = vmul.f32 %v734, %v734
      %v1023 = vmul.f32 %v735, %v735
      %v1024 = vmul.f32 %v736, %v736
      %v1025 = vmul.f32 %v737, %v737
      %v1026 = vmul.f32 %v738, %v738
      %v1027 = vmul.f32 %v739, %v739
      %v1028 = vmul.f32 %v740, %v740
      %v1029 = vmul.f32 %v741, %v741
      %v1030 = vmul.f32 %v742, %v742
      %v1031 = vmul.f32 %v743, %v743
      %v1032 = vmul.f32 %v744, %v744
      %v1033 = vmul.f32 %v745, %v745
      %v1034 = vmul.f32 %v746, %v746
      %v1035 = vmul.f32 %v747, %v747
      %v1036 = vmul.f32 %v748, %v748
      %v1037 = vmul.f32 %v749, %v749
      %v1038 = vmul.f32 %v750, %v750
      %v1039 = vmul.f32 %v751, %v751
      %v1040 = vmul.f32 %v752, %v752
      %v1041 = vmul.f32 %v753, %v753
      %v1042 = vmul.f32 %v754, %v754
      %v1043 = vmul.f32 %v755, %v755
      %v1044 = vsub.f32 %v980, %v1012
      %v1045 = vsub.f32 %v981, %v1013
      %v1046 = vsub.f32 %v982, %v1014
      %v1047 = vsub.f32 %v983, %v1015
      %v1048 = vsub.f32 %v984, %v1016
      %v1049 = vsub.f32 %v985, %v1017
      %v1050 = vsub.f32 %v986, %v1018
      %v1051 = vsub.f32 %v987, %v1019
      %v1052 = vsub.f32 %v988, %v1020
      %v1053 = vsub.f32 %v989, %v1021
      %v1054 = vsub.f32 %v990, %v1022
      %v1055 = vsub.f32 %v991, %v1023
      %v1056 = vsub.f32 %v992, %v1024
      %v1057 = vsub.f32 %v993, %v1025
      %v1058 = vsub.f32 %v994, %v1026
      %v1059 = vsub.f32 %v995, %v1027
      %v1060 = vsub.f32 %v996, %v1028
      %v1061 = vsub.f32 %v997, %v1029
      %v1062 = vsub.f32 %v998, %v1030
      %v1063 = vsub.f32 %v999, %v1031
      %v1064 = vsub.f32 %v1000, %v1032
      %v1065 = vsub.f32 %v1001, %v1033
      %v1066 = vsub.f32 %v1002, %v1034
      %v1067 = vsub.f32 %v1003, %v1035
      %v1068 = vsub.f32 %v1004, %v1036
      %v1069 = vsub.f32 %v1005, %v1037
      %v1070 = vsub.f32 %v1006, %v1038
      %v1071 = vsub.f32 %v1007, %v1039
      %v1072 = vsub.f32 %v1008, %v1040
      %v1073 = vsub.f32 %v1009, %v1041
      %v1074 = vsub.f32 %v1010, %v1042
      %v1075 = vsub.f32 %v1011, %v1043
      %v1076 = vsub.f32 %v437, %v724
      %v1077 = vsub.f32 %v440, %v725
      %v1078 = vsub.f32 %v443, %v726
      %v1079 = vsub.f32 %v446, %v727
      %v1080 = vsub.f32 %v449, %v728
      %v1081 = vsub.f32 %v452, %v729
      %v1082 = vsub.f32 %v455, %v730
      %v1083 = vsub.f32 %v458, %v731
      %v1084 = vsub.f32 %v461, %v732
      %v1085 = vsub.f32 %v464, %v733
      %v1086 = vsub.f32 %v467, %v734
      %v1087 = vsub.f32 %v470, %v735
      %v1088 = vsub.f32 %v473, %v736
      %v1089 = vsub.f32 %v476, %v737
      %v1090 = vsub.f32 %v479, %v738
      %v1091 = vsub.f32 %v482, %v739
      %v1092 = vsub.f32 %v485, %v740
      %v1093 = vsub.f32 %v488, %v741
      %v1094 = vsub.f32 %v491, %v742
      %v1095 = vsub.f32 %v494, %v743
      %v1096 = vsub.f32 %v497, %v744
      %v1097 = vsub.f32 %v500, %v745
      %v1098 = vsub.f32 %v503, %v746
      %v1099 = vsub.f32 %v506, %v747
      %v1100 = vsub.f32 %v509, %v748
      %v1101 = vsub.f32 %v512, %v749
      %v1102 = vsub.f32 %v515, %v750
      %v1103 = vsub.f32 %v518, %v751
      %v1104 = vsub.f32 %v521, %v752
      %v1105 = vsub.f32 %v524, %v753
      %v1106 = vsub.f32 %v527, %v754
      %v1107 = vsub.f32 %v530, %v755
      %v1108 = vadd.f32 %v1044, 0.8
      %v1109 = vadd.f32 %v1045, 0.8
      %v1110 = vadd.f32 %v1046, 0.8
      %v1111 = vadd.f32 %v1047, 0.8
      %v1112 = vadd.f32 %v1048, 0.8
      %v1113 = vadd.f32 %v1049, 0.8
      %v1114 = vadd.f32 %v1050, 0.8
      %v1115 = vadd.f32 %v1051, 0.8
      %v1116 = vadd.f32 %v1052, 0.8
      %v1117 = vadd.f32 %v1053, 0.8
      %v1118 = vadd.f32 %v1054, 0.8
      %v1119 = vadd.f32 %v1055, 0.8
      %v1120 = vadd.f32 %v1056, 0.8
      %v1121 = vadd.f32 %v1057, 0.8
      %v1122 = vadd.f32 %v1058, 0.8
      %v1123 = vadd.f32 %v1059, 0.8
      %v1124 = vadd.f32 %v1060, 0.8
      %v1125 = vadd.f32 %v1061, 0.8
      %v1126 = vadd.f32 %v1062, 0.8
      %v1127 = vadd.f32 %v1063, 0.8
      %v1128 = vadd.f32 %v1064, 0.8
      %v1129 = vadd.f32 %v1065, 0.8
      %v1130 = vadd.f32 %v1066, 0.8
      %v1131 = vadd.f32 %v1067, 0.8
      %v1132 = vadd.f32 %v1068, 0.8
      %v1133 = vadd.f32 %v1069, 0.8
      %v1134 = vadd.f32 %v1070, 0.8
      %v1135 = vadd.f32 %v1071, 0.8
      %v1136 = vadd.f32 %v1072, 0.8
      %v1137 = vadd.f32 %v1073, 0.8
      %v1138 = vadd.f32 %v1074, 0.8
      %v1139 = vadd.f32 %v1075, 0.8
      %v1140 = vrsqrt.pop %v1108
      %v1141 = vmul.f32 %v1140, %v1108
      %v1142 = vmul.f32 %v1141, %v1140
      %v1143 = vmul.f32 0.5, %v1142
      %v1144 = vsub.f32 1.5, %v1143
      %v1145 = vmul.f32 %v1140, %v1144
      %vm1146 = vweird.f32 %v1108
      %vm1147 = vweird.f32 %v1140
      %vm1148 = vmor %vm1146, %vm1147
      %v1149 = vsel %vm1148, %v1140, %v1145
      %v1150 = vrsqrt.pop %v1109
      %v1151 = vmul.f32 %v1150, %v1109
      %v1152 = vmul.f32 %v1151, %v1150
      %v1153 = vmul.f32 0.5, %v1152
      %v1154 = vsub.f32 1.5, %v1153
      %v1155 = vmul.f32 %v1150, %v1154
      %vm1156 = vweird.f32 %v1109
      %vm1157 = vweird.f32 %v1150
      %vm1158 = vmor %vm1156, %vm1157
      %v1159 = vsel %vm1158, %v1150, %v1155
      %v1160 = vrsqrt.pop %v1110
      %v1161 = vmul.f32 %v1160, %v1110
      %v1162 = vmul.f32 %v1161, %v1160
      %v1163 = vmul.f32 0.5, %v1162
      %v1164 = vsub.f32 1.5, %v1163
      %v1165 = vmul.f32 %v1160, %v1164
      %vm1166 = vweird.f32 %v1110
      %vm1167 = vweird.f32 %v1160
      %vm1168 = vmor %vm1166, %vm1167
      %v1169 = vsel %vm1168, %v1160, %v1165
      %v1170 = vrsqrt.pop %v1111
      %v1171 = vmul.f32 %v1170, %v1111
      %v1172 = vmul.f32 %v1171, %v1170
      %v1173 = vmul.f32 0.5, %v1172
      %v1174 = vsub.f32 1.5, %v1173
      %v1175 = vmul.f32 %v1170, %v1174
      %vm1176 = vweird.f32 %v1111
      %vm1177 = vweird.f32 %v1170
      %vm1178 = vmor %vm1176, %vm1177
      %v1179 = vsel %vm1178, %v1170, %v1175
      %v1180 = vrsqrt.pop %v1112
      %v1181 = vmul.f32 %v1180, %v1112
      %v1182 = vmul.f32 %v1181, %v1180
      %v1183 = vmul.f32 0.5, %v1182
      %v1184 = vsub.f32 1.5, %v1183
      %v1185 = vmul.f32 %v1180, %v1184
      %vm1186 = vweird.f32 %v1112
      %vm1187 = vweird.f32 %v1180
      %vm1188 = vmor %vm1186, %vm1187
      %v1189 = vsel %vm1188, %v1180, %v1185
      %v1190 = vrsqrt.pop %v1113
      %v1191 = vmul.f32 %v1190, %v1113
      %v1192 = vmul.f32 %v1191, %v1190
      %v1193 = vmul.f32 0.5, %v1192
      %v1194 = vsub.f32 1.5, %v1193
      %v1195 = vmul.f32 %v1190, %v1194
      %vm1196 = vweird.f32 %v1113
      %vm1197 = vweird.f32 %v1190
      %vm1198 = vmor %vm1196, %vm1197
      %v1199 = vsel %vm1198, %v1190, %v1195
      %v1200 = vrsqrt.pop %v1114
      %v1201 = vmul.f32 %v1200, %v1114
      %v1202 = vmul.f32 %v1201, %v1200
      %v1203 = vmul.f32 0.5, %v1202
      %v1204 = vsub.f32 1.5, %v1203
      %v1205 = vmul.f32 %v1200, %v1204
      %vm1206 = vweird.f32 %v1114
      %vm1207 = vweird.f32 %v1200
      %vm1208 = vmor %vm1206, %vm1207
      %v1209 = vsel %vm1208, %v1200, %v1205
      %v1210 = vrsqrt.pop %v1115
      %v1211 = vmul.f32 %v1210, %v1115
      %v1212 = vmul.f32 %v1211, %v1210
      %v1213 = vmul.f32 0.5, %v1212
      %v1214 = vsub.f32 1.5, %v1213
      %v1215 = vmul.f32 %v1210, %v1214
      %vm1216 = vweird.f32 %v1115
      %vm1217 = vweird.f32 %v1210
      %vm1218 = vmor %vm1216, %vm1217
      %v1219 = vsel %vm1218, %v1210, %v1215
      %v1220 = vrsqrt.pop %v1116
      %v1221 = vmul.f32 %v1220, %v1116
      %v1222 = vmul.f32 %v1221, %v1220
      %v1223 = vmul.f32 0.5, %v1222
      %v1224 = vsub.f32 1.5, %v1223
      %v1225 = vmul.f32 %v1220, %v1224
      %vm1226 = vweird.f32 %v1116
      %vm1227 = vweird.f32 %v1220
      %vm1228 = vmor %vm1226, %vm1227
      %v1229 = vsel %vm1228, %v1220, %v1225
      %v1230 = vrsqrt.pop %v1117
      %v1231 = vmul.f32 %v1230, %v1117
      %v1232 = vmul.f32 %v1231, %v1230
      %v1233 = vmul.f32 0.5, %v1232
      %v1234 = vsub.f32 1.5, %v1233
      %v1235 = vmul.f32 %v1230, %v1234
      %vm1236 = vweird.f32 %v1117
      %vm1237 = vweird.f32 %v1230
      %vm1238 = vmor %vm1236, %vm1237
      %v1239 = vsel %vm1238, %v1230, %v1235
      %v1240 = vrsqrt.pop %v1118
      %v1241 = vmul.f32 %v1240, %v1118
      %v1242 = vmul.f32 %v1241, %v1240
      %v1243 = vmul.f32 0.5, %v1242
      %v1244 = vsub.f32 1.5, %v1243
      %v1245 = vmul.f32 %v1240, %v1244
      %vm1246 = vweird.f32 %v1118
      %vm1247 = vweird.f32 %v1240
      %vm1248 = vmor %vm1246, %vm1247
      %v1249 = vsel %vm1248, %v1240, %v1245
      %v1250 = vrsqrt.pop %v1119
      %v1251 = vmul.f32 %v1250, %v1119
      %v1252 = vmul.f32 %v1251, %v1250
      %v1253 = vmul.f32 0.5, %v1252
      %v1254 = vsub.f32 1.5, %v1253
      %v1255 = vmul.f32 %v1250, %v1254
      %vm1256 = vweird.f32 %v1119
      %vm1257 = vweird.f32 %v1250
      %vm1258 = vmor %vm1256, %vm1257
      %v1259 = vsel %vm1258, %v1250, %v1255
      %v1260 = vrsqrt.pop %v1120
      %v1261 = vmul.f32 %v1260, %v1120
      %v1262 = vmul.f32 %v1261, %v1260
      %v1263 = vmul.f32 0.5, %v1262
      %v1264 = vsub.f32 1.5, %v1263
      %v1265 = vmul.f32 %v1260, %v1264
      %vm1266 = vweird.f32 %v1120
      %vm1267 = vweird.f32 %v1260
      %vm1268 = vmor %vm1266, %vm1267
      %v1269 = vsel %vm1268, %v1260, %v1265
      %v1270 = vrsqrt.pop %v1121
      %v1271 = vmul.f32 %v1270, %v1121
      %v1272 = vmul.f32 %v1271, %v1270
      %v1273 = vmul.f32 0.5, %v1272
      %v1274 = vsub.f32 1.5, %v1273
      %v1275 = vmul.f32 %v1270, %v1274
      %vm1276 = vweird.f32 %v1121
      %vm1277 = vweird.f32 %v1270
      %vm1278 = vmor %vm1276, %vm1277
      %v1279 = vsel %vm1278, %v1270, %v1275
      %v1280 = vrsqrt.pop %v1122
      %v1281 = vmul.f32 %v1280, %v1122
      %v1282 = vmul.f32 %v1281, %v1280
      %v1283 = vmul.f32 0.5, %v1282
      %v1284 = vsub.f32 1.5, %v1283
      %v1285 = vmul.f32 %v1280, %v1284
      %vm1286 = vweird.f32 %v1122
      %vm1287 = vweird.f32 %v1280
      %vm1288 = vmor %vm1286, %vm1287
      %v1289 = vsel %vm1288, %v1280, %v1285
      %v1290 = vrsqrt.pop %v1123
      %v1291 = vmul.f32 %v1290, %v1123
      %v1292 = vmul.f32 %v1291, %v1290
      %v1293 = vmul.f32 0.5, %v1292
      %v1294 = vsub.f32 1.5, %v1293
      %v1295 = vmul.f32 %v1290, %v1294
      %vm1296 = vweird.f32 %v1123
      %vm1297 = vweird.f32 %v1290
      %vm1298 = vmor %vm1296, %vm1297
      %v1299 = vsel %vm1298, %v1290, %v1295
      %v1300 = vrsqrt.pop %v1124
      %v1301 = vmul.f32 %v1300, %v1124
      %v1302 = vmul.f32 %v1301, %v1300
      %v1303 = vmul.f32 0.5, %v1302
      %v1304 = vsub.f32 1.5, %v1303
      %v1305 = vmul.f32 %v1300, %v1304
      %vm1306 = vweird.f32 %v1124
      %vm1307 = vweird.f32 %v1300
      %vm1308 = vmor %vm1306, %vm1307
      %v1309 = vsel %vm1308, %v1300, %v1305
      %v1310 = vrsqrt.pop %v1125
      %v1311 = vmul.f32 %v1310, %v1125
      %v1312 = vmul.f32 %v1311, %v1310
      %v1313 = vmul.f32 0.5, %v1312
      %v1314 = vsub.f32 1.5, %v1313
      %v1315 = vmul.f32 %v1310, %v1314
      %vm1316 = vweird.f32 %v1125
      %vm1317 = vweird.f32 %v1310
      %vm1318 = vmor %vm1316, %vm1317
      %v1319 = vsel %vm1318, %v1310, %v1315
      %v1320 = vrsqrt.pop %v1126
      %v1321 = vmul.f32 %v1320, %v1126
      %v1322 = vmul.f32 %v1321, %v1320
      %v1323 = vmul.f32 0.5, %v1322
      %v1324 = vsub.f32 1.5, %v1323
      %v1325 = vmul.f32 %v1320, %v1324
      %vm1326 = vweird.f32 %v1126
      %vm1327 = vweird.f32 %v1320
      %vm1328 = vmor %vm1326, %vm1327
      %v1329 = vsel %vm1328, %v1320, %v1325
      %v1330 = vrsqrt.pop %v1127
      %v1331 = vmul.f32 %v1330, %v1127
      %v1332 = vmul.f32 %v1331, %v1330
      %v1333 = vmul.f32 0.5, %v1332
      %v1334 = vsub.f32 1.5, %v1333
      %v1335 = vmul.f32 %v1330, %v1334
      %vm1336 = vweird.f32 %v1127
      %vm1337 = vweird.f32 %v1330
      %vm1338 = vmor %vm1336, %vm1337
      %v1339 = vsel %vm1338, %v1330, %v1335
      %v1340 = vrsqrt.pop %v1128
      %v1341 = vmul.f32 %v1340, %v1128
      %v1342 = vmul.f32 %v1341, %v1340
      %v1343 = vmul.f32 0.5, %v1342
      %v1344 = vsub.f32 1.5, %v1343
      %v1345 = vmul.f32 %v1340, %v1344
      %vm1346 = vweird.f32 %v1128
      %vm1347 = vweird.f32 %v1340
      %vm1348 = vmor %vm1346, %vm1347
      %v1349 = vsel %vm1348, %v1340, %v1345
      %v1350 = vrsqrt.pop %v1129
      %v1351 = vmul.f32 %v1350, %v1129
      %v1352 = vmul.f32 %v1351, %v1350
      %v1353 = vmul.f32 0.5, %v1352
      %v1354 = vsub.f32 1.5, %v1353
      %v1355 = vmul.f32 %v1350, %v1354
      %vm1356 = vweird.f32 %v1129
      %vm1357 = vweird.f32 %v1350
      %vm1358 = vmor %vm1356, %vm1357
      %v1359 = vsel %vm1358, %v1350, %v1355
      %v1360 = vrsqrt.pop %v1130
      %v1361 = vmul.f32 %v1360, %v1130
      %v1362 = vmul.f32 %v1361, %v1360
      %v1363 = vmul.f32 0.5, %v1362
      %v1364 = vsub.f32 1.5, %v1363
      %v1365 = vmul.f32 %v1360, %v1364
      %vm1366 = vweird.f32 %v1130
      %vm1367 = vweird.f32 %v1360
      %vm1368 = vmor %vm1366, %vm1367
      %v1369 = vsel %vm1368, %v1360, %v1365
      %v1370 = vrsqrt.pop %v1131
      %v1371 = vmul.f32 %v1370, %v1131
      %v1372 = vmul.f32 %v1371, %v1370
      %v1373 = vmul.f32 0.5, %v1372
      %v1374 = vsub.f32 1.5, %v1373
      %v1375 = vmul.f32 %v1370, %v1374
      %vm1376 = vweird.f32 %v1131
      %vm1377 = vweird.f32 %v1370
      %vm1378 = vmor %vm1376, %vm1377
      %v1379 = vsel %vm1378, %v1370, %v1375
      %v1380 = vrsqrt.pop %v1132
      %v1381 = vmul.f32 %v1380, %v1132
      %v1382 = vmul.f32 %v1381, %v1380
      %v1383 = vmul.f32 0.5, %v1382
      %v1384 = vsub.f32 1.5, %v1383
      %v1385 = vmul.f32 %v1380, %v1384
      %vm1386 = vweird.f32 %v1132
      %vm1387 = vweird.f32 %v1380
      %vm1388 = vmor %vm1386, %vm1387
      %v1389 = vsel %vm1388, %v1380, %v1385
      %v1390 = vrsqrt.pop %v1133
      %v1391 = vmul.f32 %v1390, %v1133
      %v1392 = vmul.f32 %v1391, %v1390
      %v1393 = vmul.f32 0.5, %v1392
      %v1394 = vsub.f32 1.5, %v1393
      %v1395 = vmul.f32 %v1390, %v1394
      %vm1396 = vweird.f32 %v1133
      %vm1397 = vweird.f32 %v1390
      %vm1398 = vmor %vm1396, %vm1397
      %v1399 = vsel %vm1398, %v1390, %v1395
      %v1400 = vrsqrt.pop %v1134
      %v1401 = vmul.f32 %v1400, %v1134
      %v1402 = vmul.f32 %v1401, %v1400
      %v1403 = vmul.f32 0.5, %v1402
      %v1404 = vsub.f32 1.5, %v1403
      %v1405 = vmul.f32 %v1400, %v1404
      %vm1406 = vweird.f32 %v1134
      %vm1407 = vweird.f32 %v1400
      %vm1408 = vmor %vm1406, %vm1407
      %v1409 = vsel %vm1408, %v1400, %v1405
      %v1410 = vrsqrt.pop %v1135
      %v1411 = vmul.f32 %v1410, %v1135
      %v1412 = vmul.f32 %v1411, %v1410
      %v1413 = vmul.f32 0.5, %v1412
      %v1414 = vsub.f32 1.5, %v1413
      %v1415 = vmul.f32 %v1410, %v1414
      %vm1416 = vweird.f32 %v1135
      %vm1417 = vweird.f32 %v1410
      %vm1418 = vmor %vm1416, %vm1417
      %v1419 = vsel %vm1418, %v1410, %v1415
      %v1420 = vrsqrt.pop %v1136
      %v1421 = vmul.f32 %v1420, %v1136
      %v1422 = vmul.f32 %v1421, %v1420
      %v1423 = vmul.f32 0.5, %v1422
      %v1424 = vsub.f32 1.5, %v1423
      %v1425 = vmul.f32 %v1420, %v1424
      %vm1426 = vweird.f32 %v1136
      %vm1427 = vweird.f32 %v1420
      %vm1428 = vmor %vm1426, %vm1427
      %v1429 = vsel %vm1428, %v1420, %v1425
      %v1430 = vrsqrt.pop %v1137
      %v1431 = vmul.f32 %v1430, %v1137
      %v1432 = vmul.f32 %v1431, %v1430
      %v1433 = vmul.f32 0.5, %v1432
      %v1434 = vsub.f32 1.5, %v1433
      %v1435 = vmul.f32 %v1430, %v1434
      %vm1436 = vweird.f32 %v1137
      %vm1437 = vweird.f32 %v1430
      %vm1438 = vmor %vm1436, %vm1437
      %v1439 = vsel %vm1438, %v1430, %v1435
      %v1440 = vrsqrt.pop %v1138
      %v1441 = vmul.f32 %v1440, %v1138
      %v1442 = vmul.f32 %v1441, %v1440
      %v1443 = vmul.f32 0.5, %v1442
      %v1444 = vsub.f32 1.5, %v1443
      %v1445 = vmul.f32 %v1440, %v1444
      %vm1446 = vweird.f32 %v1138
      %vm1447 = vweird.f32 %v1440
      %vm1448 = vmor %vm1446, %vm1447
      %v1449 = vsel %vm1448, %v1440, %v1445
      %v1450 = vrsqrt.pop %v1139
      %v1451 = vmul.f32 %v1450, %v1139
      %v1452 = vmul.f32 %v1451, %v1450
      %v1453 = vmul.f32 0.5, %v1452
      %v1454 = vsub.f32 1.5, %v1453
      %v1455 = vmul.f32 %v1450, %v1454
      %vm1456 = vweird.f32 %v1139
      %vm1457 = vweird.f32 %v1450
      %vm1458 = vmor %vm1456, %vm1457
      %v1459 = vsel %vm1458, %v1450, %v1455
      %v1460 = vmul.f32 %v1076, %v1149
      %v1461 = vmul.f32 %v1077, %v1159
      %v1462 = vmul.f32 %v1078, %v1169
      %v1463 = vmul.f32 %v1079, %v1179
      %v1464 = vmul.f32 %v1080, %v1189
      %v1465 = vmul.f32 %v1081, %v1199
      %v1466 = vmul.f32 %v1082, %v1209
      %v1467 = vmul.f32 %v1083, %v1219
      %v1468 = vmul.f32 %v1084, %v1229
      %v1469 = vmul.f32 %v1085, %v1239
      %v1470 = vmul.f32 %v1086, %v1249
      %v1471 = vmul.f32 %v1087, %v1259
      %v1472 = vmul.f32 %v1088, %v1269
      %v1473 = vmul.f32 %v1089, %v1279
      %v1474 = vmul.f32 %v1090, %v1289
      %v1475 = vmul.f32 %v1091, %v1299
      %v1476 = vmul.f32 %v1092, %v1309
      %v1477 = vmul.f32 %v1093, %v1319
      %v1478 = vmul.f32 %v1094, %v1329
      %v1479 = vmul.f32 %v1095, %v1339
      %v1480 = vmul.f32 %v1096, %v1349
      %v1481 = vmul.f32 %v1097, %v1359
      %v1482 = vmul.f32 %v1098, %v1369
      %v1483 = vmul.f32 %v1099, %v1379
      %v1484 = vmul.f32 %v1100, %v1389
      %v1485 = vmul.f32 %v1101, %v1399
      %v1486 = vmul.f32 %v1102, %v1409
      %v1487 = vmul.f32 %v1103, %v1419
      %v1488 = vmul.f32 %v1104, %v1429
      %v1489 = vmul.f32 %v1105, %v1439
      %v1490 = vmul.f32 %v1106, %v1449
      %v1491 = vmul.f32 %v1107, %v1459
      %v1492 = vmul.f32 %v1460, 0.2
      %v1493 = vmul.f32 %v1461, 0.2
      %v1494 = vmul.f32 %v1462, 0.2
      %v1495 = vmul.f32 %v1463, 0.2
      %v1496 = vmul.f32 %v1464, 0.2
      %v1497 = vmul.f32 %v1465, 0.2
      %v1498 = vmul.f32 %v1466, 0.2
      %v1499 = vmul.f32 %v1467, 0.2
      %v1500 = vmul.f32 %v1468, 0.2
      %v1501 = vmul.f32 %v1469, 0.2
      %v1502 = vmul.f32 %v1470, 0.2
      %v1503 = vmul.f32 %v1471, 0.2
      %v1504 = vmul.f32 %v1472, 0.2
      %v1505 = vmul.f32 %v1473, 0.2
      %v1506 = vmul.f32 %v1474, 0.2
      %v1507 = vmul.f32 %v1475, 0.2
      %v1508 = vmul.f32 %v1476, 0.2
      %v1509 = vmul.f32 %v1477, 0.2
      %v1510 = vmul.f32 %v1478, 0.2
      %v1511 = vmul.f32 %v1479, 0.2
      %v1512 = vmul.f32 %v1480, 0.2
      %v1513 = vmul.f32 %v1481, 0.2
      %v1514 = vmul.f32 %v1482, 0.2
      %v1515 = vmul.f32 %v1483, 0.2
      %v1516 = vmul.f32 %v1484, 0.2
      %v1517 = vmul.f32 %v1485, 0.2
      %v1518 = vmul.f32 %v1486, 0.2
      %v1519 = vmul.f32 %v1487, 0.2
      %v1520 = vmul.f32 %v1488, 0.2
      %v1521 = vmul.f32 %v1489, 0.2
      %v1522 = vmul.f32 %v1490, 0.2
      %v1523 = vmul.f32 %v1491, 0.2
      %v1524 = vmax.f32 %v1460, %v1492
      %v1525 = vmax.f32 %v1461, %v1493
      %v1526 = vmax.f32 %v1462, %v1494
      %v1527 = vmax.f32 %v1463, %v1495
      %v1528 = vmax.f32 %v1464, %v1496
      %v1529 = vmax.f32 %v1465, %v1497
      %v1530 = vmax.f32 %v1466, %v1498
      %v1531 = vmax.f32 %v1467, %v1499
      %v1532 = vmax.f32 %v1468, %v1500
      %v1533 = vmax.f32 %v1469, %v1501
      %v1534 = vmax.f32 %v1470, %v1502
      %v1535 = vmax.f32 %v1471, %v1503
      %v1536 = vmax.f32 %v1472, %v1504
      %v1537 = vmax.f32 %v1473, %v1505
      %v1538 = vmax.f32 %v1474, %v1506
      %v1539 = vmax.f32 %v1475, %v1507
      %v1540 = vmax.f32 %v1476, %v1508
      %v1541 = vmax.f32 %v1477, %v1509
      %v1542 = vmax.f32 %v1478, %v1510
      %v1543 = vmax.f32 %v1479, %v1511
      %v1544 = vmax.f32 %v1480, %v1512
      %v1545 = vmax.f32 %v1481, %v1513
      %v1546 = vmax.f32 %v1482, %v1514
      %v1547 = vmax.f32 %v1483, %v1515
      %v1548 = vmax.f32 %v1484, %v1516
      %v1549 = vmax.f32 %v1485, %v1517
      %v1550 = vmax.f32 %v1486, %v1518
      %v1551 = vmax.f32 %v1487, %v1519
      %v1552 = vmax.f32 %v1488, %v1520
      %v1553 = vmax.f32 %v1489, %v1521
      %v1554 = vmax.f32 %v1490, %v1522
      %v1555 = vmax.f32 %v1491, %v1523
      %v1556 = vld [vmem:[%s3] sm:$0xff]
      %v1557 = vld [vmem:[%s3 + $0x8] sm:$0xff]
      %v1558 = vld [vmem:[%s3 + $0x10] sm:$0xff]
      %v1559 = vld [vmem:[%s3 + $0x18] sm:$0xff]
      %v1560 = vld [vmem:[%s3 + $0x20] sm:$0xff]
      %v1561 = vld [vmem:[%s3 + $0x28] sm:$0xff]
      %v1562 = vld [vmem:[%s3 + $0x30] sm:$0xff]
      %v1563 = vld [vmem:[%s3 + $0x38] sm:$0xff]
      %v1564 = vld [vmem:[%s3 + $0x40] sm:$0xff]
      %v1565 = vld [vmem:[%s3 + $0x48] sm:$0xff]
      %v1566 = vld [vmem:[%s3 + $0x50] sm:$0xff]
      %v1567 = vld [vmem:[%s3 + $0x58] sm:$0xff]
      %v1568 = vld [vmem:[%s3 + $0x60] sm:$0xff]
      %v1569 = vld [vmem:[%s3 + $0x68] sm:$0xff]
      %v1570 = vld [vmem:[%s3 + $0x70] sm:$0xff]
      %v1571 = vld [vmem:[%s3 + $0x78] sm:$0xff]
      %v1572 = vld [vmem:[%s4] sm:$0x1]
      %v1574 = vperm.slane %v1572, 0
      %1576 = vmatpush.msra.mxu0 %v1571
      %1577 = vmatpush.msra.mxu0 %v1570
      %1578 = vmatpush.msra.mxu0 %v1569
      %1579 = vmatpush.msra.mxu0 %v1568
      %1580 = vmatpush.msra.mxu0 %v1567
      %1581 = vmatpush.msra.mxu0 %v1566
      %1582 = vmatpush.msra.mxu0 %v1565
      %1583 = vmatpush.msra.mxu0 %v1564
      %1584 = vmatpush.msra.mxu0 %v1563
      %1585 = vmatpush.msra.mxu0 %v1562
      %1586 = vmatpush.msra.mxu0 %v1561
      %1587 = vmatpush.msra.mxu0 %v1560
      %1588 = vmatpush.msra.mxu0 %v1559
      %1589 = vmatpush.msra.mxu0 %v1558
      %1590 = vmatpush.msra.mxu0 %v1557
      %1591 = vmatpush.msra.mxu0 %v1556
      %1592 = vmatmul.f32.gmra.mxu0 %v1524
      %v1593 = vpop.f32.mrf.mxu0
      %v1594 = vadd.f32 %v1574, %v1593
      %1595 = vmatmul.f32.gmra.mxu0 %v1525
      %v1596 = vpop.f32.mrf.mxu0
      %v1597 = vadd.f32 %v1574, %v1596
      %1598 = vmatmul.f32.gmra.mxu0 %v1526
      %v1599 = vpop.f32.mrf.mxu0
      %v1600 = vadd.f32 %v1574, %v1599
      %1601 = vmatmul.f32.gmra.mxu0 %v1527
      %v1602 = vpop.f32.mrf.mxu0
      %v1603 = vadd.f32 %v1574, %v1602
      %1604 = vmatmul.f32.gmra.mxu0 %v1528
      %v1605 = vpop.f32.mrf.mxu0
      %v1606 = vadd.f32 %v1574, %v1605
      %1607 = vmatmul.f32.gmra.mxu0 %v1529
      %v1608 = vpop.f32.mrf.mxu0
      %v1609 = vadd.f32 %v1574, %v1608
      %1610 = vmatmul.f32.gmra.mxu0 %v1530
      %v1611 = vpop.f32.mrf.mxu0
      %v1612 = vadd.f32 %v1574, %v1611
      %1613 = vmatmul.f32.gmra.mxu0 %v1531
      %v1614 = vpop.f32.mrf.mxu0
      %v1615 = vadd.f32 %v1574, %v1614
      %1616 = vmatmul.f32.gmra.mxu0 %v1532
      %v1617 = vpop.f32.mrf.mxu0
      %v1618 = vadd.f32 %v1574, %v1617
      %1619 = vmatmul.f32.gmra.mxu0 %v1533
      %v1620 = vpop.f32.mrf.mxu0
      %v1621 = vadd.f32 %v1574, %v1620
      %1622 = vmatmul.f32.gmra.mxu0 %v1534
      %v1623 = vpop.f32.mrf.mxu0
      %v1624 = vadd.f32 %v1574, %v1623
      %1625 = vmatmul.f32.gmra.mxu0 %v1535
      %v1626 = vpop.f32.mrf.mxu0
      %v1627 = vadd.f32 %v1574, %v1626
      %1628 = vmatmul.f32.gmra.mxu0 %v1536
      %v1629 = vpop.f32.mrf.mxu0
      %v1630 = vadd.f32 %v1574, %v1629
      %1631 = vmatmul.f32.gmra.mxu0 %v1537
      %v1632 = vpop.f32.mrf.mxu0
      %v1633 = vadd.f32 %v1574, %v1632
      %1634 = vmatmul.f32.gmra.mxu0 %v1538
      %v1635 = vpop.f32.mrf.mxu0
      %v1636 = vadd.f32 %v1574, %v1635
      %1637 = vmatmul.f32.gmra.mxu0 %v1539
      %v1638 = vpop.f32.mrf.mxu0
      %v1639 = vadd.f32 %v1574, %v1638
      %1640 = vmatmul.f32.gmra.mxu0 %v1540
      %v1641 = vpop.f32.mrf.mxu0
      %v1642 = vadd.f32 %v1574, %v1641
      %1643 = vmatmul.f32.gmra.mxu0 %v1541
      %v1644 = vpop.f32.mrf.mxu0
      %v1645 = vadd.f32 %v1574, %v1644
      %1646 = vmatmul.f32.gmra.mxu0 %v1542
      %v1647 = vpop.f32.mrf.mxu0
      %v1648 = vadd.f32 %v1574, %v1647
      %1649 = vmatmul.f32.gmra.mxu0 %v1543
      %v1650 = vpop.f32.mrf.mxu0
      %v1651 = vadd.f32 %v1574, %v1650
      %1652 = vmatmul.f32.gmra.mxu0 %v1544
      %v1653 = vpop.f32.mrf.mxu0
      %v1654 = vadd.f32 %v1574, %v1653
      %1655 = vmatmul.f32.gmra.mxu0 %v1545
      %v1656 = vpop.f32.mrf.mxu0
      %v1657 = vadd.f32 %v1574, %v1656
      %1658 = vmatmul.f32.gmra.mxu0 %v1546
      %v1659 = vpop.f32.mrf.mxu0
      %v1660 = vadd.f32 %v1574, %v1659
      %1661 = vmatmul.f32.gmra.mxu0 %v1547
      %v1662 = vpop.f32.mrf.mxu0
      %v1663 = vadd.f32 %v1574, %v1662
      %1664 = vmatmul.f32.gmra.mxu0 %v1548
      %v1665 = vpop.f32.mrf.mxu0
      %v1666 = vadd.f32 %v1574, %v1665
      %1667 = vmatmul.f32.gmra.mxu0 %v1549
      %v1668 = vpop.f32.mrf.mxu0
      %v1669 = vadd.f32 %v1574, %v1668
      %1670 = vmatmul.f32.gmra.mxu0 %v1550
      %v1671 = vpop.f32.mrf.mxu0
      %v1672 = vadd.f32 %v1574, %v1671
      %1673 = vmatmul.f32.gmra.mxu0 %v1551
      %v1674 = vpop.f32.mrf.mxu0
      %v1675 = vadd.f32 %v1574, %v1674
      %1676 = vmatmul.f32.gmra.mxu0 %v1552
      %v1677 = vpop.f32.mrf.mxu0
      %v1678 = vadd.f32 %v1574, %v1677
      %1679 = vmatmul.f32.gmra.mxu0 %v1553
      %v1680 = vpop.f32.mrf.mxu0
      %v1681 = vadd.f32 %v1574, %v1680
      %1682 = vmatmul.f32.gmra.mxu0 %v1554
      %v1683 = vpop.f32.mrf.mxu0
      %v1684 = vadd.f32 %v1574, %v1683
      %1685 = vmatmul.f32.gmra.mxu0 %v1555
      %v1686 = vpop.f32.mrf.mxu0
      %v1687 = vadd.f32 %v1574, %v1686
      %1688 = vdwg.mxu0
      %v1689 = vmul.f32 %v1594, 0.2
      %v1690 = vmul.f32 %v1597, 0.2
      %v1691 = vmul.f32 %v1600, 0.2
      %v1692 = vmul.f32 %v1603, 0.2
      %v1693 = vmul.f32 %v1606, 0.2
      %v1694 = vmul.f32 %v1609, 0.2
      %v1695 = vmul.f32 %v1612, 0.2
      %v1696 = vmul.f32 %v1615, 0.2
      %v1697 = vmul.f32 %v1618, 0.2
      %v1698 = vmul.f32 %v1621, 0.2
      %v1699 = vmul.f32 %v1624, 0.2
      %v1700 = vmul.f32 %v1627, 0.2
      %v1701 = vmul.f32 %v1630, 0.2
      %v1702 = vmul.f32 %v1633, 0.2
      %v1703 = vmul.f32 %v1636, 0.2
      %v1704 = vmul.f32 %v1639, 0.2
      %v1705 = vmul.f32 %v1642, 0.2
      %v1706 = vmul.f32 %v1645, 0.2
      %v1707 = vmul.f32 %v1648, 0.2
      %v1708 = vmul.f32 %v1651, 0.2
      %v1709 = vmul.f32 %v1654, 0.2
      %v1710 = vmul.f32 %v1657, 0.2
      %v1711 = vmul.f32 %v1660, 0.2
      %v1712 = vmul.f32 %v1663, 0.2
      %v1713 = vmul.f32 %v1666, 0.2
      %v1714 = vmul.f32 %v1669, 0.2
      %v1715 = vmul.f32 %v1672, 0.2
      %v1716 = vmul.f32 %v1675, 0.2
      %v1717 = vmul.f32 %v1678, 0.2
      %v1718 = vmul.f32 %v1681, 0.2
      %v1719 = vmul.f32 %v1684, 0.2
      %v1720 = vmul.f32 %v1687, 0.2
      %v1721 = vmax.f32 %v1594, %v1689
      %v1722 = vmax.f32 %v1597, %v1690
      %v1723 = vmax.f32 %v1600, %v1691
      %v1724 = vmax.f32 %v1603, %v1692
      %v1725 = vmax.f32 %v1606, %v1693
      %v1726 = vmax.f32 %v1609, %v1694
      %v1727 = vmax.f32 %v1612, %v1695
      %v1728 = vmax.f32 %v1615, %v1696
      %v1729 = vmax.f32 %v1618, %v1697
      %v1730 = vmax.f32 %v1621, %v1698
      %v1731 = vmax.f32 %v1624, %v1699
      %v1732 = vmax.f32 %v1627, %v1700
      %v1733 = vmax.f32 %v1630, %v1701
      %v1734 = vmax.f32 %v1633, %v1702
      %v1735 = vmax.f32 %v1636, %v1703
      %v1736 = vmax.f32 %v1639, %v1704
      %v1737 = vmax.f32 %v1642, %v1705
      %v1738 = vmax.f32 %v1645, %v1706
      %v1739 = vmax.f32 %v1648, %v1707
      %v1740 = vmax.f32 %v1651, %v1708
      %v1741 = vmax.f32 %v1654, %v1709
      %v1742 = vmax.f32 %v1657, %v1710
      %v1743 = vmax.f32 %v1660, %v1711
      %v1744 = vmax.f32 %v1663, %v1712
      %v1745 = vmax.f32 %v1666, %v1713
      %v1746 = vmax.f32 %v1669, %v1714
      %v1747 = vmax.f32 %v1672, %v1715
      %v1748 = vmax.f32 %v1675, %v1716
      %v1749 = vmax.f32 %v1678, %v1717
      %v1750 = vmax.f32 %v1681, %v1718
      %v1751 = vmax.f32 %v1684, %v1719
      %v1752 = vmax.f32 %v1687, %v1720
      %v1753 = vld [vmem:[%s5] sm:$0xff]
      %v1754 = vld [vmem:[%s5 + $0x8] sm:$0xff]
      %v1755 = vld [vmem:[%s5 + $0x10] sm:$0xff]
      %v1756 = vld [vmem:[%s5 + $0x18] sm:$0xff]
      %v1757 = vld [vmem:[%s5 + $0x20] sm:$0xff]
      %v1758 = vld [vmem:[%s5 + $0x28] sm:$0xff]
      %v1759 = vld [vmem:[%s5 + $0x30] sm:$0xff]
      %v1760 = vld [vmem:[%s5 + $0x38] sm:$0xff]
      %v1761 = vld [vmem:[%s5 + $0x40] sm:$0xff]
      %v1762 = vld [vmem:[%s5 + $0x48] sm:$0xff]
      %v1763 = vld [vmem:[%s5 + $0x50] sm:$0xff]
      %v1764 = vld [vmem:[%s5 + $0x58] sm:$0xff]
      %v1765 = vld [vmem:[%s5 + $0x60] sm:$0xff]
      %v1766 = vld [vmem:[%s5 + $0x68] sm:$0xff]
      %v1767 = vld [vmem:[%s5 + $0x70] sm:$0xff]
      %v1768 = vld [vmem:[%s5 + $0x78] sm:$0xff]
      %v1769 = vld [vmem:[%s6] sm:$0x1]
      %v1771 = vperm.slane %v1769, 0
      %1773 = vmatpush.msra.mxu0 %v1768
      %1774 = vmatpush.msra.mxu0 %v1767
      %1775 = vmatpush.msra.mxu0 %v1766
      %1776 = vmatpush.msra.mxu0 %v1765
      %1777 = vmatpush.msra.mxu0 %v1764
      %1778 = vmatpush.msra.mxu0 %v1763
      %1779 = vmatpush.msra.mxu0 %v1762
      %1780 = vmatpush.msra.mxu0 %v1761
      %1781 = vmatpush.msra.mxu0 %v1760
      %1782 = vmatpush.msra.mxu0 %v1759
      %1783 = vmatpush.msra.mxu0 %v1758
      %1784 = vmatpush.msra.mxu0 %v1757
      %1785 = vmatpush.msra.mxu0 %v1756
      %1786 = vmatpush.msra.mxu0 %v1755
      %1787 = vmatpush.msra.mxu0 %v1754
      %1788 = vmatpush.msra.mxu0 %v1753
      %1789 = vmatmul.f32.gmra.mxu0 %v1721
      %v1790 = vpop.f32.mrf.mxu0
      %v1791 = vadd.f32 %v1771, %v1790
      %1792 = vmatmul.f32.gmra.mxu0 %v1722
      %v1793 = vpop.f32.mrf.mxu0
      %v1794 = vadd.f32 %v1771, %v1793
      %1795 = vmatmul.f32.gmra.mxu0 %v1723
      %v1796 = vpop.f32.mrf.mxu0
      %v1797 = vadd.f32 %v1771, %v1796
      %1798 = vmatmul.f32.gmra.mxu0 %v1724
      %v1799 = vpop.f32.mrf.mxu0
      %v1800 = vadd.f32 %v1771, %v1799
      %1801 = vmatmul.f32.gmra.mxu0 %v1725
      %v1802 = vpop.f32.mrf.mxu0
      %v1803 = vadd.f32 %v1771, %v1802
      %1804 = vmatmul.f32.gmra.mxu0 %v1726
      %v1805 = vpop.f32.mrf.mxu0
      %v1806 = vadd.f32 %v1771, %v1805
      %1807 = vmatmul.f32.gmra.mxu0 %v1727
      %v1808 = vpop.f32.mrf.mxu0
      %v1809 = vadd.f32 %v1771, %v1808
      %1810 = vmatmul.f32.gmra.mxu0 %v1728
      %v1811 = vpop.f32.mrf.mxu0
      %v1812 = vadd.f32 %v1771, %v1811
      %1813 = vmatmul.f32.gmra.mxu0 %v1729
      %v1814 = vpop.f32.mrf.mxu0
      %v1815 = vadd.f32 %v1771, %v1814
      %1816 = vmatmul.f32.gmra.mxu0 %v1730
      %v1817 = vpop.f32.mrf.mxu0
      %v1818 = vadd.f32 %v1771, %v1817
      %1819 = vmatmul.f32.gmra.mxu0 %v1731
      %v1820 = vpop.f32.mrf.mxu0
      %v1821 = vadd.f32 %v1771, %v1820
      %1822 = vmatmul.f32.gmra.mxu0 %v1732
      %v1823 = vpop.f32.mrf.mxu0
      %v1824 = vadd.f32 %v1771, %v1823
      %1825 = vmatmul.f32.gmra.mxu0 %v1733
      %v1826 = vpop.f32.mrf.mxu0
      %v1827 = vadd.f32 %v1771, %v1826
      %1828 = vmatmul.f32.gmra.mxu0 %v1734
      %v1829 = vpop.f32.mrf.mxu0
      %v1830 = vadd.f32 %v1771, %v1829
      %1831 = vmatmul.f32.gmra.mxu0 %v1735
      %v1832 = vpop.f32.mrf.mxu0
      %v1833 = vadd.f32 %v1771, %v1832
      %1834 = vmatmul.f32.gmra.mxu0 %v1736
      %v1835 = vpop.f32.mrf.mxu0
      %v1836 = vadd.f32 %v1771, %v1835
      %1837 = vmatmul.f32.gmra.mxu0 %v1737
      %v1838 = vpop.f32.mrf.mxu0
      %v1839 = vadd.f32 %v1771, %v1838
      %1840 = vmatmul.f32.gmra.mxu0 %v1738
      %v1841 = vpop.f32.mrf.mxu0
      %v1842 = vadd.f32 %v1771, %v1841
      %1843 = vmatmul.f32.gmra.mxu0 %v1739
      %v1844 = vpop.f32.mrf.mxu0
      %v1845 = vadd.f32 %v1771, %v1844
      %1846 = vmatmul.f32.gmra.mxu0 %v1740
      %v1847 = vpop.f32.mrf.mxu0
      %v1848 = vadd.f32 %v1771, %v1847
      %1849 = vmatmul.f32.gmra.mxu0 %v1741
      %v1850 = vpop.f32.mrf.mxu0
      %v1851 = vadd.f32 %v1771, %v1850
      %1852 = vmatmul.f32.gmra.mxu0 %v1742
      %v1853 = vpop.f32.mrf.mxu0
      %v1854 = vadd.f32 %v1771, %v1853
      %1855 = vmatmul.f32.gmra.mxu0 %v1743
      %v1856 = vpop.f32.mrf.mxu0
      %v1857 = vadd.f32 %v1771, %v1856
      %1858 = vmatmul.f32.gmra.mxu0 %v1744
      %v1859 = vpop.f32.mrf.mxu0
      %v1860 = vadd.f32 %v1771, %v1859
      %1861 = vmatmul.f32.gmra.mxu0 %v1745
      %v1862 = vpop.f32.mrf.mxu0
      %v1863 = vadd.f32 %v1771, %v1862
      %1864 = vmatmul.f32.gmra.mxu0 %v1746
      %v1865 = vpop.f32.mrf.mxu0
      %v1866 = vadd.f32 %v1771, %v1865
      %1867 = vmatmul.f32.gmra.mxu0 %v1747
      %v1868 = vpop.f32.mrf.mxu0
      %v1869 = vadd.f32 %v1771, %v1868
      %1870 = vmatmul.f32.gmra.mxu0 %v1748
      %v1871 = vpop.f32.mrf.mxu0
      %v1872 = vadd.f32 %v1771, %v1871
      %1873 = vmatmul.f32.gmra.mxu0 %v1749
      %v1874 = vpop.f32.mrf.mxu0
      %v1875 = vadd.f32 %v1771, %v1874
      %1876 = vmatmul.f32.gmra.mxu0 %v1750
      %v1877 = vpop.f32.mrf.mxu0
      %v1878 = vadd.f32 %v1771, %v1877
      %1879 = vmatmul.f32.gmra.mxu0 %v1751
      %v1880 = vpop.f32.mrf.mxu0
      %v1881 = vadd.f32 %v1771, %v1880
      %1882 = vmatmul.f32.gmra.mxu0 %v1752
      %v1883 = vpop.f32.mrf.mxu0
      %v1884 = vadd.f32 %v1771, %v1883
      %1885 = vdwg.mxu0
      %v1886 = vtanh.pop %v1791
      %v1887 = vtanh.pop %v1794
      %v1888 = vtanh.pop %v1797
      %v1889 = vtanh.pop %v1800
      %v1890 = vtanh.pop %v1803
      %v1891 = vtanh.pop %v1806
      %v1892 = vtanh.pop %v1809
      %v1893 = vtanh.pop %v1812
      %v1894 = vtanh.pop %v1815
      %v1895 = vtanh.pop %v1818
      %v1896 = vtanh.pop %v1821
      %v1897 = vtanh.pop %v1824
      %v1898 = vtanh.pop %v1827
      %v1899 = vtanh.pop %v1830
      %v1900 = vtanh.pop %v1833
      %v1901 = vtanh.pop %v1836
      %v1902 = vtanh.pop %v1839
      %v1903 = vtanh.pop %v1842
      %v1904 = vtanh.pop %v1845
      %v1905 = vtanh.pop %v1848
      %v1906 = vtanh.pop %v1851
      %v1907 = vtanh.pop %v1854
      %v1908 = vtanh.pop %v1857
      %v1909 = vtanh.pop %v1860
      %v1910 = vtanh.pop %v1863
      %v1911 = vtanh.pop %v1866
      %v1912 = vtanh.pop %v1869
      %v1913 = vtanh.pop %v1872
      %v1914 = vtanh.pop %v1875
      %v1915 = vtanh.pop %v1878
      %v1916 = vtanh.pop %v1881
      %v1917 = vtanh.pop %v1884
      %1918 = vst.msk [vmem:[%s280] sm:$0xff] %vm322, %v1886
      %1919 = vst.msk [vmem:[%s280 + $0x8] sm:$0xff] %vm322, %v1887
      %1920 = vst.msk [vmem:[%s280 + $0x10] sm:$0xff] %vm322, %v1888
      %1921 = vst.msk [vmem:[%s280 + $0x18] sm:$0xff] %vm322, %v1889
      %1922 = vst.msk [vmem:[%s280 + $0x20] sm:$0xff] %vm322, %v1890
      %1923 = vst.msk [vmem:[%s280 + $0x28] sm:$0xff] %vm322, %v1891
      %1924 = vst.msk [vmem:[%s280 + $0x30] sm:$0xff] %vm322, %v1892
      %1925 = vst.msk [vmem:[%s280 + $0x38] sm:$0xff] %vm322, %v1893
      %1926 = vst.msk [vmem:[%s280 + $0x40] sm:$0xff] %vm322, %v1894
      %1927 = vst.msk [vmem:[%s280 + $0x48] sm:$0xff] %vm322, %v1895
      %1928 = vst.msk [vmem:[%s280 + $0x50] sm:$0xff] %vm322, %v1896
      %1929 = vst.msk [vmem:[%s280 + $0x58] sm:$0xff] %vm322, %v1897
      %1930 = vst.msk [vmem:[%s280 + $0x60] sm:$0xff] %vm322, %v1898
      %1931 = vst.msk [vmem:[%s280 + $0x68] sm:$0xff] %vm322, %v1899
      %1932 = vst.msk [vmem:[%s280 + $0x70] sm:$0xff] %vm322, %v1900
      %1933 = vst.msk [vmem:[%s280 + $0x78] sm:$0xff] %vm322, %v1901
      %1934 = vst.msk [vmem:[%s280 + $0x80] sm:$0xff] %vm322, %v1902
      %1935 = vst.msk [vmem:[%s280 + $0x88] sm:$0xff] %vm322, %v1903
      %1936 = vst.msk [vmem:[%s280 + $0x90] sm:$0xff] %vm322, %v1904
      %1937 = vst.msk [vmem:[%s280 + $0x98] sm:$0xff] %vm322, %v1905
      %1938 = vst.msk [vmem:[%s280 + $0xa0] sm:$0xff] %vm322, %v1906
      %1939 = vst.msk [vmem:[%s280 + $0xa8] sm:$0xff] %vm322, %v1907
      %1940 = vst.msk [vmem:[%s280 + $0xb0] sm:$0xff] %vm322, %v1908
      %1941 = vst.msk [vmem:[%s280 + $0xb8] sm:$0xff] %vm322, %v1909
      %1942 = vst.msk [vmem:[%s280 + $0xc0] sm:$0xff] %vm322, %v1910
      %1943 = vst.msk [vmem:[%s280 + $0xc8] sm:$0xff] %vm322, %v1911
      %1944 = vst.msk [vmem:[%s280 + $0xd0] sm:$0xff] %vm322, %v1912
      %1945 = vst.msk [vmem:[%s280 + $0xd8] sm:$0xff] %vm322, %v1913
      %1946 = vst.msk [vmem:[%s280 + $0xe0] sm:$0xff] %vm322, %v1914
      %1947 = vst.msk [vmem:[%s280 + $0xe8] sm:$0xff] %vm322, %v1915
      %1948 = vst.msk [vmem:[%s280 + $0xf0] sm:$0xff] %vm322, %v1916
      %1949 = vst.msk [vmem:[%s280 + $0xf8] sm:$0xff] %vm322, %v1917
      %s1950 = smul.u32 32, %s18
      %p1951 = scmp.lt.s32.totalorder %s1950, 63
      %s1952 = scalar_select %p1951, %s1950, 63
      %s1953 = smul.addr %s1952, 8
      %s1954 = scalar_lea.vmem %s7, %s1953
      // Predicated region
      $region49: #{feature_extractor_forward.1} parent=47 // pred_check
        %p1955 = pneg %p188
      $region50: #{feature_extractor_forward.1} parent=47 // pred_check_branch
        %1957 = sbr.rel (%p1955) target = $region52
      $region51: #{feature_extractor_forward.1} parent=47 // pred_region
        %s1958 = smul.u32 32, %s18
      $region52: #{feature_extractor_forward.1} parent=47 // pred_fallthru
        _
    $region48: #{feature_extractor_forward.1} parent=5 // pred_fallthru
      _
    %p1959 = scmp.le.s32.totalorder 2, %s13
    // Predicated region
    $region53: #{feature_extractor_forward.1} parent=5 // pred_check
      %p1960 = pneg %p1959
    $region54: #{feature_extractor_forward.1} parent=5 // pred_check_branch
      %1962 = sbr.rel (%p1960) target = $region56
    $region55: #{feature_extractor_forward.1} parent=5 // pred_region
      %s1963 = ssub.s32 %s13, 2
      // Predicated region
      $region57: #{feature_extractor_forward.1} parent=55 // pred_check
        %p1964 = pneg %p194
      $region58: #{feature_extractor_forward.1} parent=55 // pred_check_branch
        %1966 = sbr.rel (%p1964) target = $region60
      $region59: #{feature_extractor_forward.1} parent=55 // pred_region
        %s1967 = smul.u32 32, %s19
        %p1968 = scmp.lt.s32.totalorder %s1967, 63
        %s1969 = scalar_select %p1968, %s1967, 63
        %s1970 = smul.addr %s1969, 8
        %s1971 = scalar_lea.vmem %s7, %s1970
      $region60: #{feature_extractor_forward.1} parent=55 // pred_fallthru
        _
    $region56: #{feature_extractor_forward.1} parent=5 // pred_fallthru
      _
  $region6: #{feature_extractor_forward.1} parent=0 // loop_footer
    %s17 = sadd.s32 1, %s13
  $region7: #{feature_extractor_forward.1} parent=0 // loop_footer_branch
    %12 = sbr.rel target = $region3
  $region8: #{feature_extractor_forward.1} parent=0 // loop_exit
    _

</llo_original>
